<compile_context>
chip_gen: v6e
topology: v6e:2x2x1
jax: 0.10.0
libtpu: 0.0.40
codegen_flags: <defaults>
</compile_context>

<pallas_src>
import jax
import jax.numpy as jnp
from jax.experimental import pallas as pl
from jax.experimental.pallas import tpu as pltpu


# ----------------------------------------------------------------------------
# Helpers
# ----------------------------------------------------------------------------
def _round_up(x, m):
    return ((x + m - 1) // m) * m


def _cdiv(a, b):
    return -(-a // b)


def _vmem_capacity_bytes():
    try:
        return int(pltpu.get_tpu_info().vmem_capacity_bytes)
    except Exception:
        return 64 * 1024 * 1024  # conservative (v7x per-core figure)


def _block_vmem_bytes(tr, tc, wc, cin, wo, out_bytes):
    """Estimated VMEM for one grid step, incl. (sublane, lane) padding and
    double-buffered pipeline blocks."""
    lane, sub = 128, 16  # bf16 tile is (16, 128)
    in_main = 2 * tr * _round_up(wc, sub) * _round_up(cin, lane) * 2
    in_halo = 8 * _round_up(wc, sub) * _round_up(cin, lane) * 2
    w_blk = 9 * _round_up(cin, sub) * _round_up(tc, lane) * 2
    b_blk = 8 * _round_up(tc, lane) * 4
    out_blk = _round_up(tr * wo, sub) * _round_up(tc, lane) * out_bytes
    acc_tmp = _round_up(tr * wo, 8) * _round_up(tc, lane) * 4
    tap_tmp = 2 * tr * _round_up(wo, sub) * _round_up(cin, lane) * 2
    pipelined = 2 * (2 * (in_main + in_halo) + w_blk + b_blk + out_blk)
    return pipelined + acc_tmp + tap_tmp + (1 << 20)


def _select_tiles(Ho, Wo, Wc, Cin, Cout, out_bytes, budget):
    if Cout % 128 == 0:
        tc_cands = [c for c in (512, 256, 128) if Cout % c == 0] or [128]
    else:
        tc_cands = [Cout]  # full-dim block (exempt from 128 rule)
    tr_max = min(_round_up(Ho, 8), 512)
    tr_cands = [tr_max] + [t for t in (256, 128, 64, 32, 16, 8) if t < tr_max]
    for tc in tc_cands:
        for tr in tr_cands:
            if _block_vmem_bytes(tr, tc, Wc, Cin, Wo, out_bytes) <= budget:
                return tr, tc
    return 8, tc_cands[-1]


# ----------------------------------------------------------------------------
# Pallas kernel: fused 3x3 / stride-2 conv + folded-BN bias for one
# (batch, Cout-tile, output-row-band) grid step.
# ----------------------------------------------------------------------------
def _ds_conv_kernel(xe_ref, xeh_ref, xo_ref, xoh_ref, w_ref, b_ref, o_ref):
    # xe_ref : (1, 2*TR, Wc, Cin) even padded columns, band rows          (bf16)
    # xeh_ref: (1, 8,    Wc, Cin) even columns, 8-row halo below the band (bf16)
    # xo_ref / xoh_ref: same for odd padded columns                       (bf16)
    # w_ref  : (9, Cin, TC) conv weights [kh*3+kw, ci, co], BN-scaled     (bf16)
    # b_ref  : (1, TC) folded BN bias                                     (f32)
    # o_ref  : (1, TR*Wo, TC) output tile (NHWC rows flattened)
    two_tr, wc, cin = xe_ref.shape[1], xe_ref.shape[2], xe_ref.shape[3]
    tr = two_tr // 2
    tc = o_ref.shape[2]
    wo = o_ref.shape[1] // tr

    # Row-parity split via an outer-dim reshape (no minor-dim layout change).
    xe = xe_ref[0].reshape(tr, 2, wc, cin)
    xo = xo_ref[0].reshape(tr, 2, wc, cin)
    ce0, ce1 = xe[:, 0], xe[:, 1]          # padded rows 2r, 2r+1 (even cols)
    co0, co1 = xo[:, 0], xo[:, 1]          # padded rows 2r, 2r+1 (odd cols)
    # Rows 2r+2: shift the even-parity rows by one, append the halo row.
    ce2 = jnp.concatenate([ce0[1:], xeh_ref[0][:1]], axis=0)
    co2 = jnp.concatenate([co0[1:], xoh_ref[0][:1]], axis=0)
    even_cols = (ce0, ce1, ce2)
    odd_cols = (co0, co1, co2)

    acc = jnp.zeros((tr * wo, tc), jnp.float32)
    for kh in range(3):
        taps = (even_cols[kh][:, 0:wo, :],        # kw=0 -> padded col 2c
                odd_cols[kh][:, 0:wo, :],         # kw=1 -> padded col 2c+1
                even_cols[kh][:, 1:wo + 1, :])    # kw=2 -> padded col 2c+2
        for kw in range(3):
            lhs = taps[kw].reshape(tr * wo, cin)
            acc = acc + jnp.dot(lhs, w_ref[kh * 3 + kw],
                                preferred_element_type=jnp.float32)

    out = acc + b_ref[...]                         # f32 epilogue (bias only)
    o_ref[...] = out.reshape(1, tr * wo, tc).astype(o_ref.dtype)


# ----------------------------------------------------------------------------
# Parameters (BN pre-folded, weights pre-shaped/cast once)
# ----------------------------------------------------------------------------
def make_downsample_params(key, in_dim, out_dim, eps=1e-5):
    kw_, kg, kb, km, kv = jax.random.split(key, 5)
    w = jax.random.normal(kw_, (3, 3, in_dim, out_dim), jnp.float32) * 0.1  # HWIO
    gamma = 1.0 + 0.1 * jax.random.normal(kg, (out_dim,), jnp.float32)
    beta = 0.1 * jax.random.normal(kb, (out_dim,), jnp.float32)
    rmean = 0.1 * jax.random.normal(km, (out_dim,), jnp.float32)
    rvar = jnp.abs(jax.random.normal(kv, (out_dim,), jnp.float32)) * 0.1 + 0.9
    # Fold eval-mode BatchNorm into per-channel scale / bias (exact).
    scale = gamma / jnp.sqrt(rvar + eps)
    bias = beta - rmean * scale
    # Pre-fold scale into the conv weight, pre-shape & bf16-cast ONCE here.
    w9 = (w * scale[None, None, None, :]).reshape(9, in_dim, out_dim)
    return dict(
        w=w, scale=scale, bias_vec=bias,                       # for reference
        w9=w9.astype(jnp.bfloat16),                            # (9, Cin, Cout)
        bias=bias.reshape(1, out_dim).astype(jnp.float32),     # (1, Cout)
    )


# ----------------------------------------------------------------------------
# Forward (matches Downsample.forward: Conv3x3 s=2 p=1 + eval BN). NCHW in/out.
# ----------------------------------------------------------------------------
def downsample_forward(x_nchw, params, out_dtype=jnp.bfloat16):
    w9, b = params["w9"], params["bias"]
    Cin, Cout = int(w9.shape[1]), int(w9.shape[2])
    N, C, H, W = x_nchw.shape
    assert C == Cin
    Ho = (H + 1) // 2
    Wo = (W + 1) // 2
    Wc = Wo + 1                                   # columns per parity array

    out_bytes = jnp.dtype(out_dtype).itemsize
    cap = _vmem_capacity_bytes()
    vmem_limit = max(int(0.45 * cap), 16 * 1024 * 1024)
    budget = int(0.8 * vmem_limit)
    TR, TC = _select_tiles(Ho, Wo, Wc, Cin, Cout, out_bytes, budget)
    nb = _cdiv(Ho, TR)
    nc = _cdiv(Cout, TC)
    halo_blk = TR // 4                            # halo block index step (8-row blocks)

    # NCHW -> NHWC bf16, pad=1 (+ extra bottom/right so all blocks are in-bounds),
    # then split by COLUMN parity so every in-kernel slice is unit-stride.
    Hr = 2 * TR * nb + 8
    x = jnp.transpose(x_nchw, (0, 2, 3, 1)).astype(jnp.bfloat16)
    xp = jnp.pad(x, ((0, 0), (1, Hr - H - 1), (1, 2 * Wc - W - 1), (0, 0)))
    xce = xp[:, :, 0::2, :]                       # (N, Hr, Wc, Cin) even padded cols
    xco = xp[:, :, 1::2, :]                       # (N, Hr, Wc, Cin) odd  padded cols

    rows_out = TR * Wo if Ho < TR else Ho * Wo    # only pad rows for tiny Ho

    y = pl.pallas_call(
        _ds_conv_kernel,
        out_shape=jax.ShapeDtypeStruct((N, rows_out, Cout), out_dtype),
        grid_spec=pltpu.PrefetchScalarGridSpec(
            num_scalar_prefetch=0,
            grid=(N, nc, nb),
            in_specs=[
                pl.BlockSpec((1, 2 * TR, Wc, Cin), lambda n, c, i: (n, i, 0, 0)),
                pl.BlockSpec((1, 8, Wc, Cin),
                             lambda n, c, i: (n, (i + 1) * halo_blk, 0, 0)),
                pl.BlockSpec((1, 2 * TR, Wc, Cin), lambda n, c, i: (n, i, 0, 0)),
                pl.BlockSpec((1, 8, Wc, Cin),
                             lambda n, c, i: (n, (i + 1) * halo_blk, 0, 0)),
                pl.BlockSpec((9, Cin, TC), lambda n, c, i: (0, 0, c)),
                pl.BlockSpec((1, TC), lambda n, c, i: (0, c)),
            ],
            out_specs=pl.BlockSpec((1, TR * Wo, TC), lambda n, c, i: (n, i, c)),
        ),
        compiler_params=pltpu.CompilerParams(
            dimension_semantics=("parallel", "parallel", "parallel"),
            vmem_limit_bytes=vmem_limit,
        ),
    )(xce, xce, xco, xco, w9, b)

    if rows_out != Ho * Wo:
        y = y[:, :Ho * Wo, :]
    y = y.reshape(N, Ho, Wo, Cout)
    return jnp.transpose(y, (0, 3, 1, 2))         # NHWC -> NCHW


# ----------------------------------------------------------------------------
# Pure-JAX reference for verification
# ----------------------------------------------------------------------------
def downsample_reference(x_nchw, params):
    x = jnp.transpose(x_nchw, (0, 2, 3, 1))
    y = jax.lax.conv_general_dilated(
        x, params["w"], window_strides=(2, 2), padding=((1, 1), (1, 1)),
        dimension_numbers=("NHWC", "HWIO", "NHWC"))
    y = y * params["scale"] + params["bias_vec"]
    return jnp.transpose(y, (0, 3, 1, 2))


if __name__ == "__main__":
    key = jax.random.PRNGKey(0)
    kx, kp = jax.random.split(key)

    # Small shapes consistent with the module: batch=2, in_dim=3, 16x16, out_dim=32.
    N, C, H, W = 2, 3, 16, 16
    out_dim = 32
    x = jax.random.normal(kx, (N, C, H, W), jnp.float32)
    params = make_downsample_params(kp, in_dim=C, out_dim=out_dim)

    out = jax.block_until_ready(downsample_forward(x, params))
    ref = jax.block_until_ready(downsample_reference(x, params))

    assert out.shape == ref.shape == (N, out_dim, H // 2, W // 2), out.shape
    out_f32 = out.astype(jnp.float32)
    # bf16 matmul operands + bf16 output store -> loosened tolerance vs f32 ref.
    max_err = float(jnp.max(jnp.abs(out_f32 - ref)))
    assert jnp.allclose(out_f32, ref, rtol=3e-2, atol=3e-2), max_err

    print("KERNEL_OK")
</pallas_src>

<mosaic_0001>
module attributes {stable_mosaic.version = 11 : i64} {
  func.func @_ds_conv_kernel(%arg0: i32, %arg1: i32, %arg2: i32, %arg3: memref<1x16x9x3xbf16, #tpu.memory_space<vmem>>, %arg4: memref<1x8x9x3xbf16, #tpu.memory_space<vmem>>, %arg5: memref<1x16x9x3xbf16, #tpu.memory_space<vmem>>, %arg6: memref<1x8x9x3xbf16, #tpu.memory_space<vmem>>, %arg7: memref<9x3x32xbf16, #tpu.memory_space<vmem>>, %arg8: memref<1x32xf32, #tpu.memory_space<vmem>>, %arg9: memref<1x64x32xbf16, #tpu.memory_space<vmem>>) attributes {dimension_semantics = [#tpu.dimension_semantics<parallel>, #tpu.dimension_semantics<parallel>, #tpu.dimension_semantics<parallel>], iteration_bounds = array<i64: 2, 1, 1>, scalar_prefetch = 0 : i64, scratch_operands = 0 : i64, tpu.core_type = #tpu.core_type<tc>, window_params = [{transform_indices = @transform_0, window_bounds = array<i64: 1, 16, 9, 3>}, {transform_indices = @transform_1, window_bounds = array<i64: 1, 8, 9, 3>}, {transform_indices = @transform_2, window_bounds = array<i64: 1, 16, 9, 3>}, {transform_indices = @transform_3, window_bounds = array<i64: 1, 8, 9, 3>}, {transform_indices = @transform_4, window_bounds = array<i64: 9, 3, 32>}, {transform_indices = @transform_5, window_bounds = array<i64: 1, 32>}, {transform_indices = @transform_6, window_bounds = array<i64: 1, 64, 32>}]} {
    %c0 = arith.constant 0 : index
    %c0_0 = arith.constant 0 : index
    %c0_1 = arith.constant 0 : index
    %c0_2 = arith.constant 0 : index
    %0 = vector.load %arg3[%c0, %c0_0, %c0_1, %c0_2] : memref<1x16x9x3xbf16, #tpu.memory_space<vmem>>, vector<1x16x9x3xbf16>
    %1 = vector.shape_cast %0 : vector<1x16x9x3xbf16> to vector<16x9x3xbf16>
    %2 = vector.shape_cast %1 : vector<16x9x3xbf16> to vector<8x2x9x3xbf16>
    %c0_3 = arith.constant 0 : index
    %c0_4 = arith.constant 0 : index
    %c0_5 = arith.constant 0 : index
    %c0_6 = arith.constant 0 : index
    %3 = vector.load %arg5[%c0_3, %c0_4, %c0_5, %c0_6] : memref<1x16x9x3xbf16, #tpu.memory_space<vmem>>, vector<1x16x9x3xbf16>
    %4 = vector.shape_cast %3 : vector<1x16x9x3xbf16> to vector<16x9x3xbf16>
    %5 = vector.shape_cast %4 : vector<16x9x3xbf16> to vector<8x2x9x3xbf16>
    %6 = vector.extract_strided_slice %2 {offsets = [0, 0, 0, 0], sizes = [8, 1, 9, 3], strides = [1, 1, 1, 1]} : vector<8x2x9x3xbf16> to vector<8x1x9x3xbf16>
    %7 = vector.shape_cast %6 : vector<8x1x9x3xbf16> to vector<8x9x3xbf16>
    %8 = vector.extract_strided_slice %2 {offsets = [0, 1, 0, 0], sizes = [8, 1, 9, 3], strides = [1, 1, 1, 1]} : vector<8x2x9x3xbf16> to vector<8x1x9x3xbf16>
    %9 = vector.shape_cast %8 : vector<8x1x9x3xbf16> to vector<8x9x3xbf16>
    %10 = vector.extract_strided_slice %5 {offsets = [0, 0, 0, 0], sizes = [8, 1, 9, 3], strides = [1, 1, 1, 1]} : vector<8x2x9x3xbf16> to vector<8x1x9x3xbf16>
    %11 = vector.shape_cast %10 : vector<8x1x9x3xbf16> to vector<8x9x3xbf16>
    %12 = vector.extract_strided_slice %5 {offsets = [0, 1, 0, 0], sizes = [8, 1, 9, 3], strides = [1, 1, 1, 1]} : vector<8x2x9x3xbf16> to vector<8x1x9x3xbf16>
    %13 = vector.shape_cast %12 : vector<8x1x9x3xbf16> to vector<8x9x3xbf16>
    %14 = vector.extract_strided_slice %7 {offsets = [1, 0, 0], sizes = [7, 9, 3], strides = [1, 1, 1]} : vector<8x9x3xbf16> to vector<7x9x3xbf16>
    %c0_7 = arith.constant 0 : index
    %c0_8 = arith.constant 0 : index
    %c0_9 = arith.constant 0 : index
    %c0_10 = arith.constant 0 : index
    %15 = vector.load %arg4[%c0_7, %c0_8, %c0_9, %c0_10] : memref<1x8x9x3xbf16, #tpu.memory_space<vmem>>, vector<1x8x9x3xbf16>
    %16 = vector.shape_cast %15 : vector<1x8x9x3xbf16> to vector<8x9x3xbf16>
    %17 = vector.extract_strided_slice %16 {offsets = [0, 0, 0], sizes = [1, 9, 3], strides = [1, 1, 1]} : vector<8x9x3xbf16> to vector<1x9x3xbf16>
    %18 = tpu.concatenate %14, %17 in 0 : vector<7x9x3xbf16>, vector<1x9x3xbf16> -> vector<8x9x3xbf16>
    %19 = vector.extract_strided_slice %11 {offsets = [1, 0, 0], sizes = [7, 9, 3], strides = [1, 1, 1]} : vector<8x9x3xbf16> to vector<7x9x3xbf16>
    %c0_11 = arith.constant 0 : index
    %c0_12 = arith.constant 0 : index
    %c0_13 = arith.constant 0 : index
    %c0_14 = arith.constant 0 : index
    %20 = vector.load %arg6[%c0_11, %c0_12, %c0_13, %c0_14] : memref<1x8x9x3xbf16, #tpu.memory_space<vmem>>, vector<1x8x9x3xbf16>
    %21 = vector.shape_cast %20 : vector<1x8x9x3xbf16> to vector<8x9x3xbf16>
    %22 = vector.extract_strided_slice %21 {offsets = [0, 0, 0], sizes = [1, 9, 3], strides = [1, 1, 1]} : vector<8x9x3xbf16> to vector<1x9x3xbf16>
    %23 = tpu.concatenate %19, %22 in 0 : vector<7x9x3xbf16>, vector<1x9x3xbf16> -> vector<8x9x3xbf16>
    %cst = arith.constant 0.000000e+00 : f32
    %24 = vector.broadcast %cst : f32 to vector<64x32xf32>
    %25 = vector.extract_strided_slice %7 {offsets = [0, 0, 0], sizes = [8, 8, 3], strides = [1, 1, 1]} : vector<8x9x3xbf16> to vector<8x8x3xbf16>
    %26 = vector.extract_strided_slice %11 {offsets = [0, 0, 0], sizes = [8, 8, 3], strides = [1, 1, 1]} : vector<8x9x3xbf16> to vector<8x8x3xbf16>
    %27 = vector.extract_strided_slice %7 {offsets = [0, 1, 0], sizes = [8, 8, 3], strides = [1, 1, 1]} : vector<8x9x3xbf16> to vector<8x8x3xbf16>
    %28 = vector.shape_cast %25 : vector<8x8x3xbf16> to vector<64x3xbf16>
    %c0_15 = arith.constant 0 : index
    %c0_16 = arith.constant 0 : index
    %c0_17 = arith.constant 0 : index
    %29 = vector.load %arg7[%c0_15, %c0_16, %c0_17] : memref<9x3x32xbf16, #tpu.memory_space<vmem>>, vector<1x3x32xbf16>
    %30 = vector.shape_cast %29 : vector<1x3x32xbf16> to vector<3x32xbf16>
    %cst_18 = arith.constant dense<0.000000e+00> : vector<64x32xf32>
    %31 = tpu.matmul %28, %30, %cst_18 {dimension_numbers = #tpu.dot_dimension_numbers<[1], [0], [0], [1], [0, 0, 1, 1], [], []>} : vector<64x3xbf16>, vector<3x32xbf16>, vector<64x32xf32> -> vector<64x32xf32>
    %32 = arith.addf %24, %31 : vector<64x32xf32>
    %33 = vector.shape_cast %26 : vector<8x8x3xbf16> to vector<64x3xbf16>
    %c1 = arith.constant 1 : index
    %c0_19 = arith.constant 0 : index
    %c0_20 = arith.constant 0 : index
    %34 = vector.load %arg7[%c1, %c0_19, %c0_20] : memref<9x3x32xbf16, #tpu.memory_space<vmem>>, vector<1x3x32xbf16>
    %35 = vector.shape_cast %34 : vector<1x3x32xbf16> to vector<3x32xbf16>
    %cst_21 = arith.constant dense<0.000000e+00> : vector<64x32xf32>
    %36 = tpu.matmul %33, %35, %cst_21 {dimension_numbers = #tpu.dot_dimension_numbers<[1], [0], [0], [1], [0, 0, 1, 1], [], []>} : vector<64x3xbf16>, vector<3x32xbf16>, vector<64x32xf32> -> vector<64x32xf32>
    %37 = arith.addf %32, %36 : vector<64x32xf32>
    %38 = vector.shape_cast %27 : vector<8x8x3xbf16> to vector<64x3xbf16>
    %c2 = arith.constant 2 : index
    %c0_22 = arith.constant 0 : index
    %c0_23 = arith.constant 0 : index
    %39 = vector.load %arg7[%c2, %c0_22, %c0_23] : memref<9x3x32xbf16, #tpu.memory_space<vmem>>, vector<1x3x32xbf16>
    %40 = vector.shape_cast %39 : vector<1x3x32xbf16> to vector<3x32xbf16>
    %cst_24 = arith.constant dense<0.000000e+00> : vector<64x32xf32>
    %41 = tpu.matmul %38, %40, %cst_24 {dimension_numbers = #tpu.dot_dimension_numbers<[1], [0], [0], [1], [0, 0, 1, 1], [], []>} : vector<64x3xbf16>, vector<3x32xbf16>, vector<64x32xf32> -> vector<64x32xf32>
    %42 = arith.addf %37, %41 : vector<64x32xf32>
    %43 = vector.extract_strided_slice %9 {offsets = [0, 0, 0], sizes = [8, 8, 3], strides = [1, 1, 1]} : vector<8x9x3xbf16> to vector<8x8x3xbf16>
    %44 = vector.extract_strided_slice %13 {offsets = [0, 0, 0], sizes = [8, 8, 3], strides = [1, 1, 1]} : vector<8x9x3xbf16> to vector<8x8x3xbf16>
    %45 = vector.extract_strided_slice %9 {offsets = [0, 1, 0], sizes = [8, 8, 3], strides = [1, 1, 1]} : vector<8x9x3xbf16> to vector<8x8x3xbf16>
    %46 = vector.shape_cast %43 : vector<8x8x3xbf16> to vector<64x3xbf16>
    %c3 = arith.constant 3 : index
    %c0_25 = arith.constant 0 : index
    %c0_26 = arith.constant 0 : index
    %47 = vector.load %arg7[%c3, %c0_25, %c0_26] : memref<9x3x32xbf16, #tpu.memory_space<vmem>>, vector<1x3x32xbf16>
    %48 = vector.shape_cast %47 : vector<1x3x32xbf16> to vector<3x32xbf16>
    %cst_27 = arith.constant dense<0.000000e+00> : vector<64x32xf32>
    %49 = tpu.matmul %46, %48, %cst_27 {dimension_numbers = #tpu.dot_dimension_numbers<[1], [0], [0], [1], [0, 0, 1, 1], [], []>} : vector<64x3xbf16>, vector<3x32xbf16>, vector<64x32xf32> -> vector<64x32xf32>
    %50 = arith.addf %42, %49 : vector<64x32xf32>
    %51 = vector.shape_cast %44 : vector<8x8x3xbf16> to vector<64x3xbf16>
    %c4 = arith.constant 4 : index
    %c0_28 = arith.constant 0 : index
    %c0_29 = arith.constant 0 : index
    %52 = vector.load %arg7[%c4, %c0_28, %c0_29] : memref<9x3x32xbf16, #tpu.memory_space<vmem>>, vector<1x3x32xbf16>
    %53 = vector.shape_cast %52 : vector<1x3x32xbf16> to vector<3x32xbf16>
    %cst_30 = arith.constant dense<0.000000e+00> : vector<64x32xf32>
    %54 = tpu.matmul %51, %53, %cst_30 {dimension_numbers = #tpu.dot_dimension_numbers<[1], [0], [0], [1], [0, 0, 1, 1], [], []>} : vector<64x3xbf16>, vector<3x32xbf16>, vector<64x32xf32> -> vector<64x32xf32>
    %55 = arith.addf %50, %54 : vector<64x32xf32>
    %56 = vector.shape_cast %45 : vector<8x8x3xbf16> to vector<64x3xbf16>
    %c5 = arith.constant 5 : index
    %c0_31 = arith.constant 0 : index
    %c0_32 = arith.constant 0 : index
    %57 = vector.load %arg7[%c5, %c0_31, %c0_32] : memref<9x3x32xbf16, #tpu.memory_space<vmem>>, vector<1x3x32xbf16>
    %58 = vector.shape_cast %57 : vector<1x3x32xbf16> to vector<3x32xbf16>
    %cst_33 = arith.constant dense<0.000000e+00> : vector<64x32xf32>
    %59 = tpu.matmul %56, %58, %cst_33 {dimension_numbers = #tpu.dot_dimension_numbers<[1], [0], [0], [1], [0, 0, 1, 1], [], []>} : vector<64x3xbf16>, vector<3x32xbf16>, vector<64x32xf32> -> vector<64x32xf32>
    %60 = arith.addf %55, %59 : vector<64x32xf32>
    %61 = vector.extract_strided_slice %18 {offsets = [0, 0, 0], sizes = [8, 8, 3], strides = [1, 1, 1]} : vector<8x9x3xbf16> to vector<8x8x3xbf16>
    %62 = vector.extract_strided_slice %23 {offsets = [0, 0, 0], sizes = [8, 8, 3], strides = [1, 1, 1]} : vector<8x9x3xbf16> to vector<8x8x3xbf16>
    %63 = vector.extract_strided_slice %18 {offsets = [0, 1, 0], sizes = [8, 8, 3], strides = [1, 1, 1]} : vector<8x9x3xbf16> to vector<8x8x3xbf16>
    %64 = vector.shape_cast %61 : vector<8x8x3xbf16> to vector<64x3xbf16>
    %c6 = arith.constant 6 : index
    %c0_34 = arith.constant 0 : index
    %c0_35 = arith.constant 0 : index
    %65 = vector.load %arg7[%c6, %c0_34, %c0_35] : memref<9x3x32xbf16, #tpu.memory_space<vmem>>, vector<1x3x32xbf16>
    %66 = vector.shape_cast %65 : vector<1x3x32xbf16> to vector<3x32xbf16>
    %cst_36 = arith.constant dense<0.000000e+00> : vector<64x32xf32>
    %67 = tpu.matmul %64, %66, %cst_36 {dimension_numbers = #tpu.dot_dimension_numbers<[1], [0], [0], [1], [0, 0, 1, 1], [], []>} : vector<64x3xbf16>, vector<3x32xbf16>, vector<64x32xf32> -> vector<64x32xf32>
    %68 = arith.addf %60, %67 : vector<64x32xf32>
    %69 = vector.shape_cast %62 : vector<8x8x3xbf16> to vector<64x3xbf16>
    %c7 = arith.constant 7 : index
    %c0_37 = arith.constant 0 : index
    %c0_38 = arith.constant 0 : index
    %70 = vector.load %arg7[%c7, %c0_37, %c0_38] : memref<9x3x32xbf16, #tpu.memory_space<vmem>>, vector<1x3x32xbf16>
    %71 = vector.shape_cast %70 : vector<1x3x32xbf16> to vector<3x32xbf16>
    %cst_39 = arith.constant dense<0.000000e+00> : vector<64x32xf32>
    %72 = tpu.matmul %69, %71, %cst_39 {dimension_numbers = #tpu.dot_dimension_numbers<[1], [0], [0], [1], [0, 0, 1, 1], [], []>} : vector<64x3xbf16>, vector<3x32xbf16>, vector<64x32xf32> -> vector<64x32xf32>
    %73 = arith.addf %68, %72 : vector<64x32xf32>
    %74 = vector.shape_cast %63 : vector<8x8x3xbf16> to vector<64x3xbf16>
    %c8 = arith.constant 8 : index
    %c0_40 = arith.constant 0 : index
    %c0_41 = arith.constant 0 : index
    %75 = vector.load %arg7[%c8, %c0_40, %c0_41] : memref<9x3x32xbf16, #tpu.memory_space<vmem>>, vector<1x3x32xbf16>
    %76 = vector.shape_cast %75 : vector<1x3x32xbf16> to vector<3x32xbf16>
    %cst_42 = arith.constant dense<0.000000e+00> : vector<64x32xf32>
    %77 = tpu.matmul %74, %76, %cst_42 {dimension_numbers = #tpu.dot_dimension_numbers<[1], [0], [0], [1], [0, 0, 1, 1], [], []>} : vector<64x3xbf16>, vector<3x32xbf16>, vector<64x32xf32> -> vector<64x32xf32>
    %78 = arith.addf %73, %77 : vector<64x32xf32>
    %c0_43 = arith.constant 0 : index
    %c0_44 = arith.constant 0 : index
    %79 = vector.load %arg8[%c0_43, %c0_44] : memref<1x32xf32, #tpu.memory_space<vmem>>, vector<1x32xf32>
    %80 = vector.broadcast %79 : vector<1x32xf32> to vector<64x32xf32>
    %81 = arith.addf %78, %80 : vector<64x32xf32>
    %82 = vector.shape_cast %81 : vector<64x32xf32> to vector<1x64x32xf32>
    %83 = arith.truncf %82 : vector<1x64x32xf32> to vector<1x64x32xbf16>
    %c0_45 = arith.constant 0 : index
    %c0_46 = arith.constant 0 : index
    %c0_47 = arith.constant 0 : index
    %84 = vector.load %arg9[%c0_45, %c0_46, %c0_47] : memref<1x64x32xbf16, #tpu.memory_space<vmem>>, vector<1x64x32xbf16>
    tpu.vector_store %arg9[%c0_45, %c0_46, %c0_47], %83 {strides = array<i32>} : memref<1x64x32xbf16, #tpu.memory_space<vmem>>, vector<1x64x32xbf16>,
    return
  }
  func.func @transform_0(%arg0: i32, %arg1: i32, %arg2: i32) -> (i32, i32, i32, i32) {
    %c0_i32 = arith.constant 0 : i32
    %c0_i32_0 = arith.constant 0 : i32
    %c0_i32_1 = arith.constant 0 : i32
    return %arg0, %arg2, %c0_i32, %c0_i32_0 : i32, i32, i32, i32
  }
  func.func @transform_1(%arg0: i32, %arg1: i32, %arg2: i32) -> (i32, i32, i32, i32) {
    %c1_i32 = arith.constant 1 : i32
    %0 = arith.addi %arg2, %c1_i32 : i32
    %c2_i32 = arith.constant 2 : i32
    %1 = arith.muli %0, %c2_i32 : i32
    %c0_i32 = arith.constant 0 : i32
    %c0_i32_0 = arith.constant 0 : i32
    %c0_i32_1 = arith.constant 0 : i32
    return %arg0, %1, %c0_i32, %c0_i32_0 : i32, i32, i32, i32
  }
  func.func @transform_2(%arg0: i32, %arg1: i32, %arg2: i32) -> (i32, i32, i32, i32) {
    %c0_i32 = arith.constant 0 : i32
    %c0_i32_0 = arith.constant 0 : i32
    %c0_i32_1 = arith.constant 0 : i32
    return %arg0, %arg2, %c0_i32, %c0_i32_0 : i32, i32, i32, i32
  }
  func.func @transform_3(%arg0: i32, %arg1: i32, %arg2: i32) -> (i32, i32, i32, i32) {
    %c1_i32 = arith.constant 1 : i32
    %0 = arith.addi %arg2, %c1_i32 : i32
    %c2_i32 = arith.constant 2 : i32
    %1 = arith.muli %0, %c2_i32 : i32
    %c0_i32 = arith.constant 0 : i32
    %c0_i32_0 = arith.constant 0 : i32
    %c0_i32_1 = arith.constant 0 : i32
    return %arg0, %1, %c0_i32, %c0_i32_0 : i32, i32, i32, i32
  }
  func.func @transform_4(%arg0: i32, %arg1: i32, %arg2: i32) -> (i32, i32, i32) {
    %c0_i32 = arith.constant 0 : i32
    %c0_i32_0 = arith.constant 0 : i32
    %c0_i32_1 = arith.constant 0 : i32
    return %c0_i32, %c0_i32_0, %arg1 : i32, i32, i32
  }
  func.func @transform_5(%arg0: i32, %arg1: i32, %arg2: i32) -> (i32, i32) {
    %c0_i32 = arith.constant 0 : i32
    %c0_i32_0 = arith.constant 0 : i32
    return %c0_i32, %arg1 : i32, i32
  }
  func.func @transform_6(%arg0: i32, %arg1: i32, %arg2: i32) -> (i32, i32, i32) {
    %c0_i32 = arith.constant 0 : i32
    return %arg0, %arg2, %arg1 : i32, i32, i32
  }
}

</mosaic_0001>

<llo_original>
// kernel: tpu_custom_call.1
$region0: #{tpu_custom_call.1}
  #allocation0 [shape = 'u32[]', space=smem, size = 0x4, offset = 0x4, fixed_abs, tag = 'smem constant byte address 0x4 - core index']
  #allocation1 [shape = 'u32[144,128]{1,0:T(1,128)}', space=vmem, size = 0x12000, scoped, tag = 'internal scratch']
  %s0 = inlined_call_operand.vmem [shape: bf16[2,24,9,3], index: 0, kind: input, shape index: {}]
  %s1 = inlined_call_operand.vmem [shape: bf16[2,24,9,3], index: 1, kind: input, shape index: {}]
  %s2 = inlined_call_operand.vmem [shape: bf16[2,24,9,3], index: 2, kind: input, shape index: {}]
  %s3 = inlined_call_operand.vmem [shape: bf16[2,24,9,3], index: 3, kind: input, shape index: {}]
  %s4 = inlined_call_operand.vmem [shape: bf16[9,3,32], index: 4, kind: input, shape index: {}]
  %s5 = inlined_call_operand.vmem [shape: f32[1,32], index: 5, kind: input, shape index: {}]
  %s6 = inlined_call_operand.vmem [shape: bf16[2,64,32], index: 6, kind: output, shape index: {}]
  %s7 = sld [smem:[#allocation0]]
  $region57: #{tpu_custom_call.1} parent=0
    _
  %s9 = ssub.s32 1, %s7
  %s10 = scalar_select 0, %s9, %s7
  loop: start=0, step=1, limit=4
  $region2: #{tpu_custom_call.1} parent=0 // loop_pre_header
    _
  $region3: #{tpu_custom_call.1} parent=0 // loop_header
    %s12 = sphi 0, %s16
    %p13 = scmp.ge.s32.totalorder %s12, 4
    %s19 = sphi 0, %s38
    %s20 = sphi 0, %s34
    %s21 = sphi 0, %s30
    %s22 = sphi 0, %s19
    %s23 = sphi 0, %s20
    %s24 = sphi 0, %s21
    %s25 = sphi 0, %s22
    %s26 = sphi 0, %s23
    %s27 = sphi 0, %s24
    %s43 = sphi 0, %s45
    %s46 = sphi 0, %s43
    %s47 = sphi 0, %s46
    %s63 = sphi 0, %s47
    %s75 = sphi 0, %s77
    %s78 = sphi 0, %s75
    %s79 = sphi 0, %s78
    %s95 = sphi 0, %s79
    %s103 = sphi 0, %s105
    %s106 = sphi 0, %s103
    %s107 = sphi 0, %s106
    %s123 = sphi 0, %s107
    %s135 = sphi 0, %s137
    %s138 = sphi 0, %s135
    %s139 = sphi 0, %s138
    %s155 = sphi 0, %s139
    %s161 = sphi 0, %s163
    %s164 = sphi 0, %s161
    %s165 = sphi 0, %s164
    %s181 = sphi 0, %s165
    %s187 = sphi 0, %s189
    %s190 = sphi 0, %s187
    %s191 = sphi 0, %s190
    %s207 = sphi 0, %s191
    %s217 = sphi 0, %s219
    %s220 = sphi 0, %s217
    %s221 = sphi 0, %s220
    %s237 = sphi 0, %s221
  $region4: #{tpu_custom_call.1} parent=0 // loop_header_branch
    %15 = sbr.rel (%p13) target = $region8
  $region5: #{tpu_custom_call.1} parent=0 // loop_body
    %s17 = ssub.s32 %s12, 1
    %s18 = ssub.s32 %s12, 2
    %s28 = sadd.s32 1, %s21
    %p29 = scmp.ge.s32.totalorder %s28, 1
    %s30 = scalar_select %p29, 0, %s28
    %s31 = sadd.s32 1, %s20
    %s32 = scalar_select %p29, %s31, %s20
    %p33 = scmp.ge.s32.totalorder %s32, 1
    %s34 = scalar_select %p33, 0, %s32
    %s35 = sadd.s32 1, %s19
    %s36 = scalar_select %p33, %s35, %s19
    %p37 = scmp.ge.s32.totalorder %s36, 2
    %s38 = scalar_select %p37, 0, %s36
    %s39 = ssub.s32 %s19, %s38
    %s40 = ssub.s32 %s21, %s30
    %s41 = sor.u32 %s39, %s40
    %p42 = scmp.eq.s32.totalorder %s41, 0
    %s44 = sadd.s32 %s43, 1
    %s45 = scalar_select %p42, %s43, %s44
    %p48 = pneg %p42
    %p49 = scmp.eq.s32.totalorder %s12, 1
    %p50 = por %p48, %p49
    %p51 = scmp.ne.s32.totalorder %s43, %s46
    %p52 = scmp.eq.s32.totalorder %s12, 0
    %p53 = por %p51, %p52
    %p54 = scmp.ne.s32.totalorder %s43, %s46
    %p55 = scmp.eq.s32.totalorder %s17, 1
    %p56 = por %p54, %p55
    %p57 = scmp.ne.s32.totalorder %s46, %s47
    %p58 = scmp.eq.s32.totalorder %s17, 0
    %p59 = por %p57, %p58
    %p60 = scmp.ne.s32.totalorder %s46, %s47
    %p61 = scmp.eq.s32.totalorder %s18, 1
    %p62 = por %p60, %p61
    %p64 = scmp.ne.s32.totalorder %s47, %s63
    %p65 = scmp.eq.s32.totalorder %s18, 0
    %p66 = por %p64, %p65
    %s67 = sadd.s32 %s21, 1
    %s68 = smul.u32 %s67, 2
    %s69 = sadd.s32 %s30, 1
    %s70 = smul.u32 %s69, 2
    %s71 = ssub.s32 %s19, %s38
    %s72 = ssub.s32 %s68, %s70
    %s73 = sor.u32 %s71, %s72
    %p74 = scmp.eq.s32.totalorder %s73, 0
    %s76 = sadd.s32 %s75, 1
    %s77 = scalar_select %p74, %s75, %s76
    %p80 = pneg %p74
    %p81 = scmp.eq.s32.totalorder %s12, 1
    %p82 = por %p80, %p81
    %p83 = scmp.ne.s32.totalorder %s75, %s78
    %p84 = scmp.eq.s32.totalorder %s12, 0
    %p85 = por %p83, %p84
    %p86 = scmp.ne.s32.totalorder %s75, %s78
    %p87 = scmp.eq.s32.totalorder %s17, 1
    %p88 = por %p86, %p87
    %p89 = scmp.ne.s32.totalorder %s78, %s79
    %p90 = scmp.eq.s32.totalorder %s17, 0
    %p91 = por %p89, %p90
    %p92 = scmp.ne.s32.totalorder %s78, %s79
    %p93 = scmp.eq.s32.totalorder %s18, 1
    %p94 = por %p92, %p93
    %p96 = scmp.ne.s32.totalorder %s79, %s95
    %p97 = scmp.eq.s32.totalorder %s18, 0
    %p98 = por %p96, %p97
    %s99 = ssub.s32 %s19, %s38
    %s100 = ssub.s32 %s21, %s30
    %s101 = sor.u32 %s99, %s100
    %p102 = scmp.eq.s32.totalorder %s101, 0
    %s104 = sadd.s32 %s103, 1
    %s105 = scalar_select %p102, %s103, %s104
    %p108 = pneg %p102
    %p109 = scmp.eq.s32.totalorder %s12, 1
    %p110 = por %p108, %p109
    %p111 = scmp.ne.s32.totalorder %s103, %s106
    %p112 = scmp.eq.s32.totalorder %s12, 0
    %p113 = por %p111, %p112
    %p114 = scmp.ne.s32.totalorder %s103, %s106
    %p115 = scmp.eq.s32.totalorder %s17, 1
    %p116 = por %p114, %p115
    %p117 = scmp.ne.s32.totalorder %s106, %s107
    %p118 = scmp.eq.s32.totalorder %s17, 0
    %p119 = por %p117, %p118
    %p120 = scmp.ne.s32.totalorder %s106, %s107
    %p121 = scmp.eq.s32.totalorder %s18, 1
    %p122 = por %p120, %p121
    %p124 = scmp.ne.s32.totalorder %s107, %s123
    %p125 = scmp.eq.s32.totalorder %s18, 0
    %p126 = por %p124, %p125
    %s127 = sadd.s32 %s21, 1
    %s128 = smul.u32 %s127, 2
    %s129 = sadd.s32 %s30, 1
    %s130 = smul.u32 %s129, 2
    %s131 = ssub.s32 %s19, %s38
    %s132 = ssub.s32 %s128, %s130
    %s133 = sor.u32 %s131, %s132
    %p134 = scmp.eq.s32.totalorder %s133, 0
    %s136 = sadd.s32 %s135, 1
    %s137 = scalar_select %p134, %s135, %s136
    %p140 = pneg %p134
    %p141 = scmp.eq.s32.totalorder %s12, 1
    %p142 = por %p140, %p141
    %p143 = scmp.ne.s32.totalorder %s135, %s138
    %p144 = scmp.eq.s32.totalorder %s12, 0
    %p145 = por %p143, %p144
    %p146 = scmp.ne.s32.totalorder %s135, %s138
    %p147 = scmp.eq.s32.totalorder %s17, 1
    %p148 = por %p146, %p147
    %p149 = scmp.ne.s32.totalorder %s138, %s139
    %p150 = scmp.eq.s32.totalorder %s17, 0
    %p151 = por %p149, %p150
    %p152 = scmp.ne.s32.totalorder %s138, %s139
    %p153 = scmp.eq.s32.totalorder %s18, 1
    %p154 = por %p152, %p153
    %p156 = scmp.ne.s32.totalorder %s139, %s155
    %p157 = scmp.eq.s32.totalorder %s18, 0
    %p158 = por %p156, %p157
    %s159 = ssub.s32 %s20, %s34
    %p160 = scmp.eq.s32.totalorder %s159, 0
    %s162 = sadd.s32 %s161, 1
    %s163 = scalar_select %p160, %s161, %s162
    %p166 = pneg %p160
    %p167 = scmp.eq.s32.totalorder %s12, 1
    %p168 = por %p166, %p167
    %p169 = scmp.ne.s32.totalorder %s161, %s164
    %p170 = scmp.eq.s32.totalorder %s12, 0
    %p171 = por %p169, %p170
    %p172 = scmp.ne.s32.totalorder %s161, %s164
    %p173 = scmp.eq.s32.totalorder %s17, 1
    %p174 = por %p172, %p173
    %p175 = scmp.ne.s32.totalorder %s164, %s165
    %p176 = scmp.eq.s32.totalorder %s17, 0
    %p177 = por %p175, %p176
    %p178 = scmp.ne.s32.totalorder %s164, %s165
    %p179 = scmp.eq.s32.totalorder %s18, 1
    %p180 = por %p178, %p179
    %p182 = scmp.ne.s32.totalorder %s165, %s181
    %p183 = scmp.eq.s32.totalorder %s18, 0
    %p184 = por %p182, %p183
    %s185 = ssub.s32 %s20, %s34
    %p186 = scmp.eq.s32.totalorder %s185, 0
    %s188 = sadd.s32 %s187, 1
    %s189 = scalar_select %p186, %s187, %s188
    %p192 = pneg %p186
    %p193 = scmp.eq.s32.totalorder %s12, 1
    %p194 = por %p192, %p193
    %p195 = scmp.ne.s32.totalorder %s187, %s190
    %p196 = scmp.eq.s32.totalorder %s12, 0
    %p197 = por %p195, %p196
    %p198 = scmp.ne.s32.totalorder %s187, %s190
    %p199 = scmp.eq.s32.totalorder %s17, 1
    %p200 = por %p198, %p199
    %p201 = scmp.ne.s32.totalorder %s190, %s191
    %p202 = scmp.eq.s32.totalorder %s17, 0
    %p203 = por %p201, %p202
    %p204 = scmp.ne.s32.totalorder %s190, %s191
    %p205 = scmp.eq.s32.totalorder %s18, 1
    %p206 = por %p204, %p205
    %p208 = scmp.ne.s32.totalorder %s191, %s207
    %p209 = scmp.eq.s32.totalorder %s18, 0
    %p210 = por %p208, %p209
    %s211 = ssub.s32 %s19, %s38
    %s212 = ssub.s32 %s21, %s30
    %s213 = sor.u32 %s211, %s212
    %s214 = ssub.s32 %s20, %s34
    %s215 = sor.u32 %s213, %s214
    %p216 = scmp.eq.s32.totalorder %s215, 0
    %s218 = sadd.s32 %s217, 1
    %s219 = scalar_select %p216, %s217, %s218
    %p222 = pneg %p216
    %p223 = scmp.eq.s32.totalorder %s12, 1
    %p224 = por %p222, %p223
    %p225 = scmp.ne.s32.totalorder %s217, %s220
    %p226 = scmp.eq.s32.totalorder %s12, 0
    %p227 = por %p225, %p226
    %p228 = scmp.ne.s32.totalorder %s217, %s220
    %p229 = scmp.eq.s32.totalorder %s17, 1
    %p230 = por %p228, %p229
    %p231 = scmp.ne.s32.totalorder %s220, %s221
    %p232 = scmp.eq.s32.totalorder %s17, 0
    %p233 = por %p231, %p232
    %p234 = scmp.ne.s32.totalorder %s220, %s221
    %p235 = scmp.eq.s32.totalorder %s18, 1
    %p236 = por %p234, %p235
    %p238 = scmp.ne.s32.totalorder %s221, %s237
    %p239 = scmp.eq.s32.totalorder %s18, 0
    %p240 = por %p238, %p239
    %p241 = scmp.le.s32.totalorder 1, %s12
    %p242 = scmp.lt.s32.totalorder %s12, 3
    %p243 = pnand %p241, %p242
    %p244 = pneg %p243
    // Predicated region
    $region9: #{tpu_custom_call.1} parent=5 // pred_check
      _
    $region10: #{tpu_custom_call.1} parent=5 // pred_check_branch
      %246 = sbr.rel (%p243) target = $region12
    $region11: #{tpu_custom_call.1} parent=5 // pred_region
      %s247 = ssub.s32 %s12, 1
      // Predicated region
      $region13: #{tpu_custom_call.1} parent=11 // pred_check
        %p248 = pneg %p177
      $region14: #{tpu_custom_call.1} parent=11 // pred_check_branch
        %250 = sbr.rel (%p248) target = $region16
      $region15: #{tpu_custom_call.1} parent=11 // pred_region
        %p251 = scmp.lt.s32.totalorder %s23, 0
        %s252 = scalar_select %p251, %s23, 0
        %s253 = smul.addr %s252, 2
        %s254 = scalar_lea.vmem %s4, %s253
      $region16: #{tpu_custom_call.1} parent=11 // pred_fallthru
        _
      // Predicated region
      $region17: #{tpu_custom_call.1} parent=11 // pred_check
        %p255 = pneg %p203
      $region18: #{tpu_custom_call.1} parent=11 // pred_check_branch
        %257 = sbr.rel (%p255) target = $region20
      $region19: #{tpu_custom_call.1} parent=11 // pred_region
        %p258 = scmp.lt.s32.totalorder %s23, 0
        %s259 = scalar_select %p258, %s23, 0
        %s260 = scalar_lea.vmem %s5, %s259
      $region20: #{tpu_custom_call.1} parent=11 // pred_fallthru
        _
    $region12: #{tpu_custom_call.1} parent=5 // pred_fallthru
      _
    %p261 = scmp.lt.s32.totalorder %s12, 2
    // Predicated region
    $region21: #{tpu_custom_call.1} parent=5 // pred_check
      %p262 = pneg %p261
    $region22: #{tpu_custom_call.1} parent=5 // pred_check_branch
      %264 = sbr.rel (%p262) target = $region24
    $region23: #{tpu_custom_call.1} parent=5 // pred_region
      // Predicated region
      $region25: #{tpu_custom_call.1} parent=23 // pred_check
        %p265 = pneg %p53
      $region26: #{tpu_custom_call.1} parent=23 // pred_check_branch
        %267 = sbr.rel (%p265) target = $region28
      $region27: #{tpu_custom_call.1} parent=23 // pred_region
        %s268 = smul.u32 16, %s21
        %s269 = ssub.s32 24, %s268
        %p270 = scmp.lt.s32.totalorder %s269, 16
        %s271 = scalar_select %p270, %s269, 16
        %s272 = smul.u32 64, %s271
        %s273 = smul.u32 %s272, 2
        %p274 = scmp.lt.s32.totalorder %s19, 1
        %s275 = scalar_select %p274, %s19, 1
        %p276 = scmp.lt.s32.totalorder %s268, 23
        %s277 = scalar_select %p276, %s268, 23
        %s278 = smul.addr %s277, 2
        %s279 = smul.addr %s275, 48
        %s280 = sadd.s32 %s278, %s279
        %s281 = smul.addr %s280, 4
        %s282 = scalar_lea.vmem %s0, %s281
        %s283 = smul.u32 16, %s21
        %s284 = ssub.s32 24, %s283
        %p285 = scmp.lt.s32.totalorder %s284, 16
        %s286 = scalar_select %p285, %s284, 16
        %s287 = smul.u32 64, %s286
        %s288 = smul.u32 %s287, 2
      $region28: #{tpu_custom_call.1} parent=23 // pred_fallthru
        _
      // Predicated region
      $region29: #{tpu_custom_call.1} parent=23 // pred_check
        %p289 = pneg %p85
      $region30: #{tpu_custom_call.1} parent=23 // pred_check_branch
        %291 = sbr.rel (%p289) target = $region32
      $region31: #{tpu_custom_call.1} parent=23 // pred_region
        %s292 = sadd.s32 %s21, 1
        %s293 = smul.u32 %s292, 2
        %s294 = smul.u32 8, %s293
        %p295 = scmp.lt.s32.totalorder %s19, 1
        %s296 = scalar_select %p295, %s19, 1
        %p297 = scmp.lt.s32.totalorder %s294, 23
        %s298 = scalar_select %p297, %s294, 23
        %s299 = smul.addr %s298, 2
        %s300 = smul.addr %s296, 48
        %s301 = sadd.s32 %s299, %s300
        %s302 = smul.addr %s301, 4
        %s303 = scalar_lea.vmem %s1, %s302
        %s304 = sadd.s32 %s21, 1
        %s305 = smul.u32 %s304, 2
        %s306 = smul.u32 8, %s305
      $region32: #{tpu_custom_call.1} parent=23 // pred_fallthru
        _
      // Predicated region
      $region33: #{tpu_custom_call.1} parent=23 // pred_check
        %p307 = pneg %p113
      $region34: #{tpu_custom_call.1} parent=23 // pred_check_branch
        %309 = sbr.rel (%p307) target = $region36
      $region35: #{tpu_custom_call.1} parent=23 // pred_region
        %s310 = smul.u32 16, %s21
        %s311 = ssub.s32 24, %s310
        %p312 = scmp.lt.s32.totalorder %s311, 16
        %s313 = scalar_select %p312, %s311, 16
        %s314 = smul.u32 64, %s313
        %s315 = smul.u32 %s314, 2
        %p316 = scmp.lt.s32.totalorder %s19, 1
        %s317 = scalar_select %p316, %s19, 1
        %p318 = scmp.lt.s32.totalorder %s310, 23
        %s319 = scalar_select %p318, %s310, 23
        %s320 = smul.addr %s319, 2
        %s321 = smul.addr %s317, 48
        %s322 = sadd.s32 %s320, %s321
        %s323 = smul.addr %s322, 4
        %s324 = scalar_lea.vmem %s2, %s323
        %s325 = smul.u32 16, %s21
        %s326 = ssub.s32 24, %s325
        %p327 = scmp.lt.s32.totalorder %s326, 16
        %s328 = scalar_select %p327, %s326, 16
        %s329 = smul.u32 64, %s328
        %s330 = smul.u32 %s329, 2
      $region36: #{tpu_custom_call.1} parent=23 // pred_fallthru
        _
      // Predicated region
      $region37: #{tpu_custom_call.1} parent=23 // pred_check
        %p331 = pneg %p145
      $region38: #{tpu_custom_call.1} parent=23 // pred_check_branch
        %333 = sbr.rel (%p331) target = $region40
      $region39: #{tpu_custom_call.1} parent=23 // pred_region
        %s334 = sadd.s32 %s21, 1
        %s335 = smul.u32 %s334, 2
        %s336 = smul.u32 8, %s335
        %p337 = scmp.lt.s32.totalorder %s19, 1
        %s338 = scalar_select %p337, %s19, 1
        %p339 = scmp.lt.s32.totalorder %s336, 23
        %s340 = scalar_select %p339, %s336, 23
        %s341 = smul.addr %s340, 2
        %s342 = smul.addr %s338, 48
        %s343 = sadd.s32 %s341, %s342
        %s344 = smul.addr %s343, 4
        %s345 = scalar_lea.vmem %s3, %s344
        %s346 = sadd.s32 %s21, 1
        %s347 = smul.u32 %s346, 2
        %s348 = smul.u32 8, %s347
      $region40: #{tpu_custom_call.1} parent=23 // pred_fallthru
        _
    $region24: #{tpu_custom_call.1} parent=5 // pred_fallthru
      _
    %p349 = scmp.le.s32.totalorder 1, %s12
    %p350 = scmp.lt.s32.totalorder %s12, 3
    %p351 = pnand %p349, %p350
    %p352 = pneg %p351
    // Predicated region
    $region41: #{tpu_custom_call.1} parent=5 // pred_check
      _
    $region42: #{tpu_custom_call.1} parent=5 // pred_check_branch
      %354 = sbr.rel (%p351) target = $region44
    $region43: #{tpu_custom_call.1} parent=5 // pred_region
      %s355 = ssub.s32 %s12, 1
      %s356 = smul.u32 16, %s24
      %s357 = ssub.s32 24, %s356
      %p358 = scmp.lt.s32.totalorder %s357, 16
      %s359 = scalar_select %p358, %s357, 16
      %s360 = smul.u32 64, %s359
      %s361 = smul.u32 %s360, 2
      %p362 = scmp.lt.s32.totalorder %s22, 1
      %s363 = scalar_select %p362, %s22, 1
      %p364 = scmp.lt.s32.totalorder %s356, 23
      %s365 = scalar_select %p364, %s356, 23
      %s366 = smul.addr %s365, 2
      %s367 = smul.addr %s363, 48
      %s368 = sadd.s32 %s366, %s367
      %s369 = smul.addr %s368, 4
      %s370 = scalar_lea.vmem %s0, %s369
      %p371 = pneg %p59
      %p372 = pneg %p56
      %s373 = sadd.s32 %s24, 1
      %s374 = smul.u32 %s373, 2
      %s375 = smul.u32 8, %s374
      %p376 = scmp.lt.s32.totalorder %s22, 1
      %s377 = scalar_select %p376, %s22, 1
      %p378 = scmp.lt.s32.totalorder %s375, 23
      %s379 = scalar_select %p378, %s375, 23
      %s380 = smul.addr %s379, 2
      %s381 = smul.addr %s377, 48
      %s382 = sadd.s32 %s380, %s381
      %s383 = smul.addr %s382, 4
      %s384 = scalar_lea.vmem %s1, %s383
      %p385 = pneg %p91
      %p386 = pneg %p88
      %s387 = smul.u32 16, %s24
      %s388 = ssub.s32 24, %s387
      %p389 = scmp.lt.s32.totalorder %s388, 16
      %s390 = scalar_select %p389, %s388, 16
      %s391 = smul.u32 64, %s390
      %s392 = smul.u32 %s391, 2
      %p393 = scmp.lt.s32.totalorder %s22, 1
      %s394 = scalar_select %p393, %s22, 1
      %p395 = scmp.lt.s32.totalorder %s387, 23
      %s396 = scalar_select %p395, %s387, 23
      %s397 = smul.addr %s396, 2
      %s398 = smul.addr %s394, 48
      %s399 = sadd.s32 %s397, %s398
      %s400 = smul.addr %s399, 4
      %s401 = scalar_lea.vmem %s2, %s400
      %p402 = pneg %p119
      %p403 = pneg %p116
      %s404 = sadd.s32 %s24, 1
      %s405 = smul.u32 %s404, 2
      %s406 = smul.u32 8, %s405
      %p407 = scmp.lt.s32.totalorder %s22, 1
      %s408 = scalar_select %p407, %s22, 1
      %p409 = scmp.lt.s32.totalorder %s406, 23
      %s410 = scalar_select %p409, %s406, 23
      %s411 = smul.addr %s410, 2
      %s412 = smul.addr %s408, 48
      %s413 = sadd.s32 %s411, %s412
      %s414 = smul.addr %s413, 4
      %s415 = scalar_lea.vmem %s3, %s414
      %p416 = pneg %p151
      %p417 = pneg %p148
      %p418 = scmp.lt.s32.totalorder %s23, 0
      %s419 = scalar_select %p418, %s23, 0
      %s420 = smul.addr %s419, 2
      %s421 = scalar_lea.vmem %s4, %s420
      %p422 = pneg %p177
      %p423 = pneg %p174
      %p424 = scmp.lt.s32.totalorder %s23, 0
      %s425 = scalar_select %p424, %s23, 0
      %s426 = scalar_lea.vmem %s5, %s425
      %p427 = pneg %p203
      %p428 = pneg %p200
      %p429 = pneg %p233
      %p430 = pneg %p230
      %s431 = smul.u32 8, %s24
      %p432 = scmp.lt.s32.totalorder %s22, 1
      %s433 = scalar_select %p432, %s22, 1
      %p434 = scmp.lt.s32.totalorder %s431, 7
      %s435 = scalar_select %p434, %s431, 7
      %p436 = scmp.lt.s32.totalorder %s23, 0
      %s437 = scalar_select %p436, %s23, 0
      %s438 = sadd.s32 %s437, %s435
      %s439 = smul.addr %s433, 8
      %s440 = sadd.s32 %s438, %s439
      %s441 = smul.addr %s440, 4
      %s442 = scalar_lea.vmem %s6, %s441
      %s443 = smul.u32 16, %s24
      %s444 = ssub.s32 24, %s443
      %p445 = scmp.lt.s32.totalorder %s444, 16
      %s446 = scalar_select %p445, %s444, 16
      %s447 = smul.u32 64, %s446
      %s448 = smul.u32 %s447, 2
      %p449 = scmp.lt.s32.totalorder %s22, 1
      %s450 = scalar_select %p449, %s22, 1
      %p451 = scmp.lt.s32.totalorder %s443, 23
      %s452 = scalar_select %p451, %s443, 23
      %s453 = smul.addr %s452, 2
      %s454 = smul.addr %s450, 48
      %s455 = sadd.s32 %s453, %s454
      %s456 = smul.addr %s455, 4
      %s457 = scalar_lea.vmem %s0, %s456
      %s458 = smul.u32 16, %s24
      %s459 = ssub.s32 24, %s458
      %p460 = scmp.lt.s32.totalorder %s459, 16
      %s461 = scalar_select %p460, %s459, 16
      %s462 = smul.u32 64, %s461
      %s463 = smul.u32 %s462, 2
      %s464 = sadd.s32 %s24, 1
      %s465 = smul.u32 %s464, 2
      %s466 = smul.u32 8, %s465
      %p467 = scmp.lt.s32.totalorder %s22, 1
      %s468 = scalar_select %p467, %s22, 1
      %p469 = scmp.lt.s32.totalorder %s466, 23
      %s470 = scalar_select %p469, %s466, 23
      %s471 = smul.addr %s470, 2
      %s472 = smul.addr %s468, 48
      %s473 = sadd.s32 %s471, %s472
      %s474 = smul.addr %s473, 4
      %s475 = scalar_lea.vmem %s1, %s474
      %s476 = sadd.s32 %s24, 1
      %s477 = smul.u32 %s476, 2
      %s478 = smul.u32 8, %s477
      %s479 = smul.u32 16, %s24
      %s480 = ssub.s32 24, %s479
      %p481 = scmp.lt.s32.totalorder %s480, 16
      %s482 = scalar_select %p481, %s480, 16
      %s483 = smul.u32 64, %s482
      %s484 = smul.u32 %s483, 2
      %p485 = scmp.lt.s32.totalorder %s22, 1
      %s486 = scalar_select %p485, %s22, 1
      %p487 = scmp.lt.s32.totalorder %s479, 23
      %s488 = scalar_select %p487, %s479, 23
      %s489 = smul.addr %s488, 2
      %s490 = smul.addr %s486, 48
      %s491 = sadd.s32 %s489, %s490
      %s492 = smul.addr %s491, 4
      %s493 = scalar_lea.vmem %s2, %s492
      %s494 = smul.u32 16, %s24
      %s495 = ssub.s32 24, %s494
      %p496 = scmp.lt.s32.totalorder %s495, 16
      %s497 = scalar_select %p496, %s495, 16
      %s498 = smul.u32 64, %s497
      %s499 = smul.u32 %s498, 2
      %s500 = sadd.s32 %s24, 1
      %s501 = smul.u32 %s500, 2
      %s502 = smul.u32 8, %s501
      %p503 = scmp.lt.s32.totalorder %s22, 1
      %s504 = scalar_select %p503, %s22, 1
      %p505 = scmp.lt.s32.totalorder %s502, 23
      %s506 = scalar_select %p505, %s502, 23
      %s507 = smul.addr %s506, 2
      %s508 = smul.addr %s504, 48
      %s509 = sadd.s32 %s507, %s508
      %s510 = smul.addr %s509, 4
      %s511 = scalar_lea.vmem %s3, %s510
      %s512 = sadd.s32 %s24, 1
      %s513 = smul.u32 %s512, 2
      %s514 = smul.u32 8, %s513
      %p515 = scmp.lt.s32.totalorder %s23, 0
      %s516 = scalar_select %p515, %s23, 0
      %s517 = smul.addr %s516, 2
      %s518 = scalar_lea.vmem %s4, %s517
      %p519 = scmp.lt.s32.totalorder %s23, 0
      %s520 = scalar_select %p519, %s23, 0
      %s521 = scalar_lea.vmem %s5, %s520
      %s522 = smul.u32 8, %s24
      %p523 = scmp.lt.s32.totalorder %s22, 1
      %s524 = scalar_select %p523, %s22, 1
      %p525 = scmp.lt.s32.totalorder %s522, 7
      %s526 = scalar_select %p525, %s522, 7
      %p527 = scmp.lt.s32.totalorder %s23, 0
      %s528 = scalar_select %p527, %s23, 0
      %s529 = sadd.s32 %s528, %s526
      %s530 = smul.addr %s524, 8
      %s531 = sadd.s32 %s529, %s530
      %s532 = smul.addr %s531, 4
      %s533 = scalar_lea.vmem %s6, %s532
      %s534 = smul.u32 8, %s24
      %v536 = vld [vmem:[%s457] sm:$0xf]
      %v537 = vld [vmem:[%s457 + $0x4] sm:$0x1]
      %v538 = vld [vmem:[%s457 + $0x8] sm:$0xf]
      %v539 = vld [vmem:[%s457 + $0xc] sm:$0x1]
      %v540 = vld [vmem:[%s457 + $0x10] sm:$0xf]
      %v541 = vld [vmem:[%s457 + $0x14] sm:$0x1]
      %v542 = vld [vmem:[%s457 + $0x18] sm:$0xf]
      %v543 = vld [vmem:[%s457 + $0x1c] sm:$0x1]
      %v544 = vld [vmem:[%s457 + $0x20] sm:$0xf]
      %v545 = vld [vmem:[%s457 + $0x24] sm:$0x1]
      %v546 = vld [vmem:[%s457 + $0x28] sm:$0xf]
      %v547 = vld [vmem:[%s457 + $0x2c] sm:$0x1]
      %v548 = vld [vmem:[%s457 + $0x30] sm:$0xf]
      %v549 = vld [vmem:[%s457 + $0x34] sm:$0x1]
      %v550 = vld [vmem:[%s457 + $0x38] sm:$0xf]
      %v551 = vld [vmem:[%s457 + $0x3c] sm:$0x1]
      %v552 = vld [vmem:[%s457 + $0x40] sm:$0xf]
      %v553 = vld [vmem:[%s457 + $0x44] sm:$0x1]
      %v554 = vld [vmem:[%s457 + $0x48] sm:$0xf]
      %v555 = vld [vmem:[%s457 + $0x4c] sm:$0x1]
      %v556 = vld [vmem:[%s457 + $0x50] sm:$0xf]
      %v557 = vld [vmem:[%s457 + $0x54] sm:$0x1]
      %v558 = vld [vmem:[%s457 + $0x58] sm:$0xf]
      %v559 = vld [vmem:[%s457 + $0x5c] sm:$0x1]
      %v560 = vld [vmem:[%s457 + $0x60] sm:$0xf]
      %v561 = vld [vmem:[%s457 + $0x64] sm:$0x1]
      %v562 = vld [vmem:[%s457 + $0x68] sm:$0xf]
      %v563 = vld [vmem:[%s457 + $0x6c] sm:$0x1]
      %v564 = vld [vmem:[%s457 + $0x70] sm:$0xf]
      %v565 = vld [vmem:[%s457 + $0x74] sm:$0x1]
      %v566 = vld [vmem:[%s457 + $0x78] sm:$0xf]
      %v567 = vld [vmem:[%s457 + $0x7c] sm:$0x1]
      %v568 = vld [vmem:[%s493] sm:$0xf]
      %v569 = vld [vmem:[%s493 + $0x8] sm:$0xf]
      %v570 = vld [vmem:[%s493 + $0x10] sm:$0xf]
      %v571 = vld [vmem:[%s493 + $0x18] sm:$0xf]
      %v572 = vld [vmem:[%s493 + $0x20] sm:$0xf]
      %v573 = vld [vmem:[%s493 + $0x28] sm:$0xf]
      %v574 = vld [vmem:[%s493 + $0x30] sm:$0xf]
      %v575 = vld [vmem:[%s493 + $0x38] sm:$0xf]
      %v576 = vld [vmem:[%s493 + $0x40] sm:$0xf]
      %v577 = vld [vmem:[%s493 + $0x48] sm:$0xf]
      %v578 = vld [vmem:[%s493 + $0x50] sm:$0xf]
      %v579 = vld [vmem:[%s493 + $0x58] sm:$0xf]
      %v580 = vld [vmem:[%s493 + $0x60] sm:$0xf]
      %v581 = vld [vmem:[%s493 + $0x68] sm:$0xf]
      %v582 = vld [vmem:[%s493 + $0x70] sm:$0xf]
      %v583 = vld [vmem:[%s493 + $0x78] sm:$0xf]
      %v584 = vld [vmem:[%s475] sm:$0xf]
      %v585 = vld [vmem:[%s475 + $0x4] sm:$0x1]
      %v586 = vld [vmem:[%s511] sm:$0xf]
      %v587 = vld [vmem:[%s518] sm:$0x3]
      %s588 = scalar_lea.vmem %s518, 2
      %v589 = vld [vmem:[%s588] sm:$0x3]
      %v598 = vunpack.c.l.b16 %v568
      %v599 = vunpack.c.l.b16 %v570
      %v600 = vunpack.c.l.b16 %v572
      %v601 = vunpack.c.l.b16 %v574
      %v602 = vunpack.c.l.b16 %v576
      %v603 = vunpack.c.l.b16 %v578
      %v604 = vunpack.c.l.b16 %v580
      %v605 = vunpack.c.l.b16 %v582
      %v606 = vpack.c.b16 %v599, %v598
      %v607 = vpack.c.b16 %v601, %v600
      %v608 = vpack.c.b16 %v603, %v602
      %v609 = vpack.c.b16 %v605, %v604
      %vm610 = vcmask 23552
      %v612 = vsel %vm610, %v606, 0
      %v615 = vsel %vm610, %v607, 0
      %v618 = vsel %vm610, %v608, 0
      %v621 = vsel %vm610, %v609, 0
      %vm623 = vcmask 1040384
      %vm624 = vcmask 1041408
      %v625 = vsel %vm623, 4294967295, 65535
      %v626 = vsel %vm624, %v625, 0
      %v628 = vand.u32 %v589, %v626
      %630 = vmatprep.subr.bf16.mxu0 0
      %631 = vmatpush1.bf16.msra.mxu0 0
      %632 = vmatprep.subr.bf16.mxu0 0
      %633 = vmatpush1.bf16.msra.mxu0 0
      %634 = vmatprep.subr.bf16.mxu0 0
      %635 = vmatpush1.bf16.msra.mxu0 0
      %636 = vmatprep.subr.bf16.mxu0 0
      %637 = vmatpush1.bf16.msra.mxu0 0
      %638 = vmatprep.subr.bf16.mxu0 0
      %639 = vmatpush1.bf16.msra.mxu0 0
      %640 = vmatprep.subr.bf16.mxu0 0
      %641 = vmatpush1.bf16.msra.mxu0 0
      %642 = vmatprep.subr.bf16.mxu0 0
      %643 = vmatpush1.bf16.msra.mxu0 0
      %644 = vmatprep.subr.bf16.mxu0 0
      %645 = vmatpush1.bf16.msra.mxu0 %v628
      %646 = vmatprep.subr.bf16.mxu0 0
      %647 = vmatpush2.bf16.msra.mxu0 0
      %648 = vmatprep.subr.bf16.mxu0 0
      %649 = vmatpush2.bf16.msra.mxu0 0
      %650 = vmatprep.subr.bf16.mxu0 0
      %651 = vmatpush2.bf16.msra.mxu0 0
      %652 = vmatprep.subr.bf16.mxu0 0
      %653 = vmatpush2.bf16.msra.mxu0 0
      %654 = vmatprep.subr.bf16.mxu0 0
      %655 = vmatpush2.bf16.msra.mxu0 0
      %656 = vmatprep.subr.bf16.mxu0 0
      %657 = vmatpush2.bf16.msra.mxu0 0
      %658 = vmatprep.subr.bf16.mxu0 0
      %659 = vmatpush2.bf16.msra.mxu0 0
      %660 = vmatprep.subr.bf16.mxu0 0
      %661 = vmatpush2.bf16.msra.mxu0 0
      %662 = vmatprep.mubr.bf16.mxu0 0
      %663 = vmatmul.mubr.bf16.gmra.mxu0 %v612
      %v664 = vpop.f32.mrf.mxu0
      %v665 = vadd.f32 0.0, %v664
      %v666 = vpop.f32.mrf.mxu0
      %v667 = vpop.f32.mrf.mxu0
      %v668 = vadd.f32 0.0, %v667
      %v669 = vpop.f32.mrf.mxu0
      %670 = vmatprep.mubr.bf16.mxu0 0
      %671 = vmatmul.mubr.bf16.gmra.mxu0 %v615
      %v672 = vpop.f32.mrf.mxu0
      %v673 = vadd.f32 0.0, %v672
      %v674 = vpop.f32.mrf.mxu0
      %v675 = vpop.f32.mrf.mxu0
      %v676 = vadd.f32 0.0, %v675
      %v677 = vpop.f32.mrf.mxu0
      %678 = vmatprep.mubr.bf16.mxu0 0
      %679 = vmatmul.mubr.bf16.gmra.mxu0 %v618
      %v680 = vpop.f32.mrf.mxu0
      %v681 = vadd.f32 0.0, %v680
      %v682 = vpop.f32.mrf.mxu0
      %v683 = vpop.f32.mrf.mxu0
      %v684 = vadd.f32 0.0, %v683
      %v685 = vpop.f32.mrf.mxu0
      %686 = vmatprep.mubr.bf16.mxu0 0
      %687 = vmatmul.mubr.bf16.gmra.mxu0 %v621
      %v688 = vpop.f32.mrf.mxu0
      %v689 = vadd.f32 0.0, %v688
      %v690 = vpop.f32.mrf.mxu0
      %v691 = vpop.f32.mrf.mxu0
      %v692 = vadd.f32 0.0, %v691
      %v693 = vpop.f32.mrf.mxu0
      %694 = vdwg.mxu0
      %v703 = vunpack.c.l.b16 %v536
      %v704 = vunpack.c.l.b16 %v540
      %v705 = vunpack.c.l.b16 %v544
      %v706 = vunpack.c.l.b16 %v548
      %v707 = vunpack.c.l.b16 %v552
      %v708 = vunpack.c.l.b16 %v556
      %v709 = vunpack.c.l.b16 %v560
      %v710 = vunpack.c.l.b16 %v564
      %v711 = vpack.c.b16 %v704, %v703
      %v712 = vpack.c.b16 %v706, %v705
      %v713 = vpack.c.b16 %v708, %v707
      %v714 = vpack.c.b16 %v710, %v709
      %v716 = vsel %vm610, %v711, 0
      %v719 = vsel %vm610, %v712, 0
      %v722 = vsel %vm610, %v713, 0
      %v725 = vsel %vm610, %v714, 0
      %v728 = vand.u32 %v587, %v626
      %730 = vmatprep.subr.bf16.mxu0 0
      %731 = vmatpush1.bf16.msra.mxu0 0
      %732 = vmatprep.subr.bf16.mxu0 0
      %733 = vmatpush1.bf16.msra.mxu0 0
      %734 = vmatprep.subr.bf16.mxu0 0
      %735 = vmatpush1.bf16.msra.mxu0 0
      %736 = vmatprep.subr.bf16.mxu0 0
      %737 = vmatpush1.bf16.msra.mxu0 0
      %738 = vmatprep.subr.bf16.mxu0 0
      %739 = vmatpush1.bf16.msra.mxu0 0
      %740 = vmatprep.subr.bf16.mxu0 0
      %741 = vmatpush1.bf16.msra.mxu0 0
      %742 = vmatprep.subr.bf16.mxu0 0
      %743 = vmatpush1.bf16.msra.mxu0 0
      %744 = vmatprep.subr.bf16.mxu0 0
      %745 = vmatpush1.bf16.msra.mxu0 %v728
      %746 = vmatprep.subr.bf16.mxu0 0
      %747 = vmatpush2.bf16.msra.mxu0 0
      %748 = vmatprep.subr.bf16.mxu0 0
      %749 = vmatpush2.bf16.msra.mxu0 0
      %750 = vmatprep.subr.bf16.mxu0 0
      %751 = vmatpush2.bf16.msra.mxu0 0
      %752 = vmatprep.subr.bf16.mxu0 0
      %753 = vmatpush2.bf16.msra.mxu0 0
      %754 = vmatprep.subr.bf16.mxu0 0
      %755 = vmatpush2.bf16.msra.mxu0 0
      %756 = vmatprep.subr.bf16.mxu0 0
      %757 = vmatpush2.bf16.msra.mxu0 0
      %758 = vmatprep.subr.bf16.mxu0 0
      %759 = vmatpush2.bf16.msra.mxu0 0
      %760 = vmatprep.subr.bf16.mxu0 0
      %761 = vmatpush2.bf16.msra.mxu0 0
      %762 = vmatprep.mubr.bf16.mxu0 0
      %763 = vmatmul.mubr.bf16.gmra.mxu0 %v716
      %v764 = vpop.f32.mrf.mxu0
      %v765 = vadd.f32 %v665, %v764
      %v766 = vpop.f32.mrf.mxu0
      %v767 = vpop.f32.mrf.mxu0
      %v768 = vadd.f32 %v668, %v767
      %v769 = vpop.f32.mrf.mxu0
      %770 = vmatprep.mubr.bf16.mxu0 0
      %771 = vmatmul.mubr.bf16.gmra.mxu0 %v719
      %v772 = vpop.f32.mrf.mxu0
      %v773 = vadd.f32 %v673, %v772
      %v774 = vpop.f32.mrf.mxu0
      %v775 = vpop.f32.mrf.mxu0
      %v776 = vadd.f32 %v676, %v775
      %v777 = vpop.f32.mrf.mxu0
      %778 = vmatprep.mubr.bf16.mxu0 0
      %779 = vmatmul.mubr.bf16.gmra.mxu0 %v722
      %v780 = vpop.f32.mrf.mxu0
      %v781 = vadd.f32 %v681, %v780
      %v782 = vpop.f32.mrf.mxu0
      %v783 = vpop.f32.mrf.mxu0
      %v784 = vadd.f32 %v684, %v783
      %v785 = vpop.f32.mrf.mxu0
      %786 = vmatprep.mubr.bf16.mxu0 0
      %787 = vmatmul.mubr.bf16.gmra.mxu0 %v725
      %v788 = vpop.f32.mrf.mxu0
      %v789 = vadd.f32 %v689, %v788
      %v790 = vpop.f32.mrf.mxu0
      %v791 = vpop.f32.mrf.mxu0
      %v792 = vadd.f32 %v692, %v791
      %v793 = vpop.f32.mrf.mxu0
      %794 = vdwg.mxu0
      %vm795 = vsmask.f32 3328
      %vm796 = vsmask.f32 7440
      %vm797 = vmor %vm795, %vm796
      %v799 = vshrl.u32 %v536, 16
      %v801 = vrot.slane %v799, 4
      %v802 = vshll.u32 %v536, 16
      %v804 = vrot.slane %v802, 5
      %v805 = vor.u32 %v801, %v804
      %v806 = vrot.slane %v805, 4
      %v808 = vshll.u32 %v537, 16
      %v810 = vrot.slane %v808, 5
      %v811 = vsel %vm797, %v806, %v810
      %v813 = vshrl.u32 %v540, 16
      %v815 = vrot.slane %v813, 4
      %v816 = vshll.u32 %v540, 16
      %v818 = vrot.slane %v816, 5
      %v819 = vor.u32 %v815, %v818
      %v820 = vrot.slane %v819, 4
      %v822 = vshll.u32 %v541, 16
      %v824 = vrot.slane %v822, 5
      %v825 = vsel %vm797, %v820, %v824
      %v827 = vshrl.u32 %v544, 16
      %v829 = vrot.slane %v827, 4
      %v830 = vshll.u32 %v544, 16
      %v832 = vrot.slane %v830, 5
      %v833 = vor.u32 %v829, %v832
      %v834 = vrot.slane %v833, 4
      %v836 = vshll.u32 %v545, 16
      %v838 = vrot.slane %v836, 5
      %v839 = vsel %vm797, %v834, %v838
      %v841 = vshrl.u32 %v548, 16
      %v843 = vrot.slane %v841, 4
      %v844 = vshll.u32 %v548, 16
      %v846 = vrot.slane %v844, 5
      %v847 = vor.u32 %v843, %v846
      %v848 = vrot.slane %v847, 4
      %v850 = vshll.u32 %v549, 16
      %v852 = vrot.slane %v850, 5
      %v853 = vsel %vm797, %v848, %v852
      %v855 = vshrl.u32 %v552, 16
      %v857 = vrot.slane %v855, 4
      %v858 = vshll.u32 %v552, 16
      %v860 = vrot.slane %v858, 5
      %v861 = vor.u32 %v857, %v860
      %v862 = vrot.slane %v861, 4
      %v864 = vshll.u32 %v553, 16
      %v866 = vrot.slane %v864, 5
      %v867 = vsel %vm797, %v862, %v866
      %v869 = vshrl.u32 %v556, 16
      %v871 = vrot.slane %v869, 4
      %v872 = vshll.u32 %v556, 16
      %v874 = vrot.slane %v872, 5
      %v875 = vor.u32 %v871, %v874
      %v876 = vrot.slane %v875, 4
      %v878 = vshll.u32 %v557, 16
      %v880 = vrot.slane %v878, 5
      %v881 = vsel %vm797, %v876, %v880
      %v883 = vshrl.u32 %v560, 16
      %v885 = vrot.slane %v883, 4
      %v886 = vshll.u32 %v560, 16
      %v888 = vrot.slane %v886, 5
      %v889 = vor.u32 %v885, %v888
      %v890 = vrot.slane %v889, 4
      %v892 = vshll.u32 %v561, 16
      %v894 = vrot.slane %v892, 5
      %v895 = vsel %vm797, %v890, %v894
      %v897 = vshrl.u32 %v564, 16
      %v899 = vrot.slane %v897, 4
      %v900 = vshll.u32 %v564, 16
      %v902 = vrot.slane %v900, 5
      %v903 = vor.u32 %v899, %v902
      %v904 = vrot.slane %v903, 4
      %v906 = vshll.u32 %v565, 16
      %v908 = vrot.slane %v906, 5
      %v909 = vsel %vm797, %v904, %v908
      %s910 = scalar_lea.vmem %s518, 4
      %v911 = vld [vmem:[%s910] sm:$0x3]
      %v912 = vunpack.c.l.b16 %v811
      %v913 = vunpack.c.l.b16 %v825
      %v914 = vunpack.c.l.b16 %v839
      %v915 = vunpack.c.l.b16 %v853
      %v916 = vunpack.c.l.b16 %v867
      %v917 = vunpack.c.l.b16 %v881
      %v918 = vunpack.c.l.b16 %v895
      %v919 = vunpack.c.l.b16 %v909
      %v920 = vpack.c.b16 %v913, %v912
      %v921 = vpack.c.b16 %v915, %v914
      %v922 = vpack.c.b16 %v917, %v916
      %v923 = vpack.c.b16 %v919, %v918
      %v925 = vsel %vm610, %v920, 0
      %v928 = vsel %vm610, %v921, 0
      %v931 = vsel %vm610, %v922, 0
      %v934 = vsel %vm610, %v923, 0
      %v937 = vand.u32 %v911, %v626
      %939 = vmatprep.subr.bf16.mxu0 0
      %940 = vmatpush1.bf16.msra.mxu0 0
      %941 = vmatprep.subr.bf16.mxu0 0
      %942 = vmatpush1.bf16.msra.mxu0 0
      %943 = vmatprep.subr.bf16.mxu0 0
      %944 = vmatpush1.bf16.msra.mxu0 0
      %945 = vmatprep.subr.bf16.mxu0 0
      %946 = vmatpush1.bf16.msra.mxu0 0
      %947 = vmatprep.subr.bf16.mxu0 0
      %948 = vmatpush1.bf16.msra.mxu0 0
      %949 = vmatprep.subr.bf16.mxu0 0
      %950 = vmatpush1.bf16.msra.mxu0 0
      %951 = vmatprep.subr.bf16.mxu0 0
      %952 = vmatpush1.bf16.msra.mxu0 0
      %953 = vmatprep.subr.bf16.mxu0 0
      %954 = vmatpush1.bf16.msra.mxu0 %v937
      %955 = vmatprep.subr.bf16.mxu0 0
      %956 = vmatpush2.bf16.msra.mxu0 0
      %957 = vmatprep.subr.bf16.mxu0 0
      %958 = vmatpush2.bf16.msra.mxu0 0
      %959 = vmatprep.subr.bf16.mxu0 0
      %960 = vmatpush2.bf16.msra.mxu0 0
      %961 = vmatprep.subr.bf16.mxu0 0
      %962 = vmatpush2.bf16.msra.mxu0 0
      %963 = vmatprep.subr.bf16.mxu0 0
      %964 = vmatpush2.bf16.msra.mxu0 0
      %965 = vmatprep.subr.bf16.mxu0 0
      %966 = vmatpush2.bf16.msra.mxu0 0
      %967 = vmatprep.subr.bf16.mxu0 0
      %968 = vmatpush2.bf16.msra.mxu0 0
      %969 = vmatprep.subr.bf16.mxu0 0
      %970 = vmatpush2.bf16.msra.mxu0 0
      %971 = vmatprep.mubr.bf16.mxu0 0
      %972 = vmatmul.mubr.bf16.gmra.mxu0 %v925
      %v973 = vpop.f32.mrf.mxu0
      %v974 = vadd.f32 0.0, %v973
      %v975 = vpop.f32.mrf.mxu0
      %v976 = vpop.f32.mrf.mxu0
      %v977 = vadd.f32 0.0, %v976
      %v978 = vpop.f32.mrf.mxu0
      %979 = vmatprep.mubr.bf16.mxu0 0
      %980 = vmatmul.mubr.bf16.gmra.mxu0 %v928
      %v981 = vpop.f32.mrf.mxu0
      %v982 = vadd.f32 0.0, %v981
      %v983 = vpop.f32.mrf.mxu0
      %v984 = vpop.f32.mrf.mxu0
      %v985 = vadd.f32 0.0, %v984
      %v986 = vpop.f32.mrf.mxu0
      %987 = vmatprep.mubr.bf16.mxu0 0
      %988 = vmatmul.mubr.bf16.gmra.mxu0 %v931
      %v989 = vpop.f32.mrf.mxu0
      %v990 = vadd.f32 0.0, %v989
      %v991 = vpop.f32.mrf.mxu0
      %v992 = vpop.f32.mrf.mxu0
      %v993 = vadd.f32 0.0, %v992
      %v994 = vpop.f32.mrf.mxu0
      %995 = vmatprep.mubr.bf16.mxu0 0
      %996 = vmatmul.mubr.bf16.gmra.mxu0 %v934
      %v997 = vpop.f32.mrf.mxu0
      %v998 = vadd.f32 0.0, %v997
      %v999 = vpop.f32.mrf.mxu0
      %v1000 = vpop.f32.mrf.mxu0
      %v1001 = vadd.f32 0.0, %v1000
      %v1002 = vpop.f32.mrf.mxu0
      %1003 = vdwg.mxu0
      %v1004 = vadd.f32 %v765, %v974
      %v1005 = vadd.f32 %v768, %v977
      %v1006 = vadd.f32 %v773, %v982
      %v1007 = vadd.f32 %v776, %v985
      %v1008 = vadd.f32 %v781, %v990
      %v1009 = vadd.f32 %v784, %v993
      %v1010 = vadd.f32 %v789, %v998
      %v1011 = vadd.f32 %v792, %v1001
      %s1012 = scalar_lea.vmem %s518, 6
      %v1013 = vld [vmem:[%s1012] sm:$0x3]
      %v1022 = vunpack.c.l.b16 %v538
      %v1023 = vunpack.c.l.b16 %v542
      %v1024 = vunpack.c.l.b16 %v546
      %v1025 = vunpack.c.l.b16 %v550
      %v1026 = vunpack.c.l.b16 %v554
      %v1027 = vunpack.c.l.b16 %v558
      %v1028 = vunpack.c.l.b16 %v562
      %v1029 = vunpack.c.l.b16 %v566
      %v1030 = vpack.c.b16 %v1023, %v1022
      %v1031 = vpack.c.b16 %v1025, %v1024
      %v1032 = vpack.c.b16 %v1027, %v1026
      %v1033 = vpack.c.b16 %v1029, %v1028
      %v1035 = vsel %vm610, %v1030, 0
      %v1038 = vsel %vm610, %v1031, 0
      %v1041 = vsel %vm610, %v1032, 0
      %v1044 = vsel %vm610, %v1033, 0
      %v1047 = vand.u32 %v1013, %v626
      %1049 = vmatprep.subr.bf16.mxu0 0
      %1050 = vmatpush1.bf16.msra.mxu0 0
      %1051 = vmatprep.subr.bf16.mxu0 0
      %1052 = vmatpush1.bf16.msra.mxu0 0
      %1053 = vmatprep.subr.bf16.mxu0 0
      %1054 = vmatpush1.bf16.msra.mxu0 0
      %1055 = vmatprep.subr.bf16.mxu0 0
      %1056 = vmatpush1.bf16.msra.mxu0 0
      %1057 = vmatprep.subr.bf16.mxu0 0
      %1058 = vmatpush1.bf16.msra.mxu0 0
      %1059 = vmatprep.subr.bf16.mxu0 0
      %1060 = vmatpush1.bf16.msra.mxu0 0
      %1061 = vmatprep.subr.bf16.mxu0 0
      %1062 = vmatpush1.bf16.msra.mxu0 0
      %1063 = vmatprep.subr.bf16.mxu0 0
      %1064 = vmatpush1.bf16.msra.mxu0 %v1047
      %1065 = vmatprep.subr.bf16.mxu0 0
      %1066 = vmatpush2.bf16.msra.mxu0 0
      %1067 = vmatprep.subr.bf16.mxu0 0
      %1068 = vmatpush2.bf16.msra.mxu0 0
      %1069 = vmatprep.subr.bf16.mxu0 0
      %1070 = vmatpush2.bf16.msra.mxu0 0
      %1071 = vmatprep.subr.bf16.mxu0 0
      %1072 = vmatpush2.bf16.msra.mxu0 0
      %1073 = vmatprep.subr.bf16.mxu0 0
      %1074 = vmatpush2.bf16.msra.mxu0 0
      %1075 = vmatprep.subr.bf16.mxu0 0
      %1076 = vmatpush2.bf16.msra.mxu0 0
      %1077 = vmatprep.subr.bf16.mxu0 0
      %1078 = vmatpush2.bf16.msra.mxu0 0
      %1079 = vmatprep.subr.bf16.mxu0 0
      %1080 = vmatpush2.bf16.msra.mxu0 0
      %1081 = vmatprep.mubr.bf16.mxu0 0
      %1082 = vmatmul.mubr.bf16.gmra.mxu0 %v1035
      %v1083 = vpop.f32.mrf.mxu0
      %v1084 = vadd.f32 0.0, %v1083
      %v1085 = vpop.f32.mrf.mxu0
      %v1086 = vpop.f32.mrf.mxu0
      %v1087 = vadd.f32 0.0, %v1086
      %v1088 = vpop.f32.mrf.mxu0
      %1089 = vmatprep.mubr.bf16.mxu0 0
      %1090 = vmatmul.mubr.bf16.gmra.mxu0 %v1038
      %v1091 = vpop.f32.mrf.mxu0
      %v1092 = vadd.f32 0.0, %v1091
      %v1093 = vpop.f32.mrf.mxu0
      %v1094 = vpop.f32.mrf.mxu0
      %v1095 = vadd.f32 0.0, %v1094
      %v1096 = vpop.f32.mrf.mxu0
      %1097 = vmatprep.mubr.bf16.mxu0 0
      %1098 = vmatmul.mubr.bf16.gmra.mxu0 %v1041
      %v1099 = vpop.f32.mrf.mxu0
      %v1100 = vadd.f32 0.0, %v1099
      %v1101 = vpop.f32.mrf.mxu0
      %v1102 = vpop.f32.mrf.mxu0
      %v1103 = vadd.f32 0.0, %v1102
      %v1104 = vpop.f32.mrf.mxu0
      %1105 = vmatprep.mubr.bf16.mxu0 0
      %1106 = vmatmul.mubr.bf16.gmra.mxu0 %v1044
      %v1107 = vpop.f32.mrf.mxu0
      %v1108 = vadd.f32 0.0, %v1107
      %v1109 = vpop.f32.mrf.mxu0
      %v1110 = vpop.f32.mrf.mxu0
      %v1111 = vadd.f32 0.0, %v1110
      %v1112 = vpop.f32.mrf.mxu0
      %1113 = vdwg.mxu0
      %v1114 = vadd.f32 %v1004, %v1084
      %v1115 = vadd.f32 %v1005, %v1087
      %v1116 = vadd.f32 %v1006, %v1092
      %v1117 = vadd.f32 %v1007, %v1095
      %v1118 = vadd.f32 %v1008, %v1100
      %v1119 = vadd.f32 %v1009, %v1103
      %v1120 = vadd.f32 %v1010, %v1108
      %v1121 = vadd.f32 %v1011, %v1111
      %s1122 = scalar_lea.vmem %s518, 8
      %v1123 = vld [vmem:[%s1122] sm:$0x3]
      %v1132 = vunpack.c.l.b16 %v569
      %v1133 = vunpack.c.l.b16 %v571
      %v1134 = vunpack.c.l.b16 %v573
      %v1135 = vunpack.c.l.b16 %v575
      %v1136 = vunpack.c.l.b16 %v577
      %v1137 = vunpack.c.l.b16 %v579
      %v1138 = vunpack.c.l.b16 %v581
      %v1139 = vunpack.c.l.b16 %v583
      %v1140 = vpack.c.b16 %v1133, %v1132
      %v1141 = vpack.c.b16 %v1135, %v1134
      %v1142 = vpack.c.b16 %v1137, %v1136
      %v1143 = vpack.c.b16 %v1139, %v1138
      %v1145 = vsel %vm610, %v1140, 0
      %v1148 = vsel %vm610, %v1141, 0
      %v1151 = vsel %vm610, %v1142, 0
      %v1154 = vsel %vm610, %v1143, 0
      %v1157 = vand.u32 %v1123, %v626
      %1159 = vmatprep.subr.bf16.mxu0 0
      %1160 = vmatpush1.bf16.msra.mxu0 0
      %1161 = vmatprep.subr.bf16.mxu0 0
      %1162 = vmatpush1.bf16.msra.mxu0 0
      %1163 = vmatprep.subr.bf16.mxu0 0
      %1164 = vmatpush1.bf16.msra.mxu0 0
      %1165 = vmatprep.subr.bf16.mxu0 0
      %1166 = vmatpush1.bf16.msra.mxu0 0
      %1167 = vmatprep.subr.bf16.mxu0 0
      %1168 = vmatpush1.bf16.msra.mxu0 0
      %1169 = vmatprep.subr.bf16.mxu0 0
      %1170 = vmatpush1.bf16.msra.mxu0 0
      %1171 = vmatprep.subr.bf16.mxu0 0
      %1172 = vmatpush1.bf16.msra.mxu0 0
      %1173 = vmatprep.subr.bf16.mxu0 0
      %1174 = vmatpush1.bf16.msra.mxu0 %v1157
      %1175 = vmatprep.subr.bf16.mxu0 0
      %1176 = vmatpush2.bf16.msra.mxu0 0
      %1177 = vmatprep.subr.bf16.mxu0 0
      %1178 = vmatpush2.bf16.msra.mxu0 0
      %1179 = vmatprep.subr.bf16.mxu0 0
      %1180 = vmatpush2.bf16.msra.mxu0 0
      %1181 = vmatprep.subr.bf16.mxu0 0
      %1182 = vmatpush2.bf16.msra.mxu0 0
      %1183 = vmatprep.subr.bf16.mxu0 0
      %1184 = vmatpush2.bf16.msra.mxu0 0
      %1185 = vmatprep.subr.bf16.mxu0 0
      %1186 = vmatpush2.bf16.msra.mxu0 0
      %1187 = vmatprep.subr.bf16.mxu0 0
      %1188 = vmatpush2.bf16.msra.mxu0 0
      %1189 = vmatprep.subr.bf16.mxu0 0
      %1190 = vmatpush2.bf16.msra.mxu0 0
      %1191 = vmatprep.mubr.bf16.mxu0 0
      %1192 = vmatmul.mubr.bf16.gmra.mxu0 %v1145
      %v1193 = vpop.f32.mrf.mxu0
      %v1194 = vadd.f32 0.0, %v1193
      %v1195 = vpop.f32.mrf.mxu0
      %v1196 = vpop.f32.mrf.mxu0
      %v1197 = vadd.f32 0.0, %v1196
      %v1198 = vpop.f32.mrf.mxu0
      %1199 = vmatprep.mubr.bf16.mxu0 0
      %1200 = vmatmul.mubr.bf16.gmra.mxu0 %v1148
      %v1201 = vpop.f32.mrf.mxu0
      %v1202 = vadd.f32 0.0, %v1201
      %v1203 = vpop.f32.mrf.mxu0
      %v1204 = vpop.f32.mrf.mxu0
      %v1205 = vadd.f32 0.0, %v1204
      %v1206 = vpop.f32.mrf.mxu0
      %1207 = vmatprep.mubr.bf16.mxu0 0
      %1208 = vmatmul.mubr.bf16.gmra.mxu0 %v1151
      %v1209 = vpop.f32.mrf.mxu0
      %v1210 = vadd.f32 0.0, %v1209
      %v1211 = vpop.f32.mrf.mxu0
      %v1212 = vpop.f32.mrf.mxu0
      %v1213 = vadd.f32 0.0, %v1212
      %v1214 = vpop.f32.mrf.mxu0
      %1215 = vmatprep.mubr.bf16.mxu0 0
      %1216 = vmatmul.mubr.bf16.gmra.mxu0 %v1154
      %v1217 = vpop.f32.mrf.mxu0
      %v1218 = vadd.f32 0.0, %v1217
      %v1219 = vpop.f32.mrf.mxu0
      %v1220 = vpop.f32.mrf.mxu0
      %v1221 = vadd.f32 0.0, %v1220
      %v1222 = vpop.f32.mrf.mxu0
      %1223 = vdwg.mxu0
      %v1224 = vadd.f32 %v1114, %v1194
      %v1225 = vadd.f32 %v1115, %v1197
      %v1226 = vadd.f32 %v1116, %v1202
      %v1227 = vadd.f32 %v1117, %v1205
      %v1228 = vadd.f32 %v1118, %v1210
      %v1229 = vadd.f32 %v1119, %v1213
      %v1230 = vadd.f32 %v1120, %v1218
      %v1231 = vadd.f32 %v1121, %v1221
      %v1233 = vshrl.u32 %v538, 16
      %v1235 = vrot.slane %v1233, 4
      %v1236 = vshll.u32 %v538, 16
      %v1238 = vrot.slane %v1236, 5
      %v1239 = vor.u32 %v1235, %v1238
      %v1240 = vrot.slane %v1239, 4
      %v1242 = vshll.u32 %v539, 16
      %v1244 = vrot.slane %v1242, 5
      %v1245 = vsel %vm797, %v1240, %v1244
      %v1247 = vshrl.u32 %v542, 16
      %v1249 = vrot.slane %v1247, 4
      %v1250 = vshll.u32 %v542, 16
      %v1252 = vrot.slane %v1250, 5
      %v1253 = vor.u32 %v1249, %v1252
      %v1254 = vrot.slane %v1253, 4
      %v1256 = vshll.u32 %v543, 16
      %v1258 = vrot.slane %v1256, 5
      %v1259 = vsel %vm797, %v1254, %v1258
      %v1261 = vshrl.u32 %v546, 16
      %v1263 = vrot.slane %v1261, 4
      %v1264 = vshll.u32 %v546, 16
      %v1266 = vrot.slane %v1264, 5
      %v1267 = vor.u32 %v1263, %v1266
      %v1268 = vrot.slane %v1267, 4
      %v1270 = vshll.u32 %v547, 16
      %v1272 = vrot.slane %v1270, 5
      %v1273 = vsel %vm797, %v1268, %v1272
      %v1275 = vshrl.u32 %v550, 16
      %v1277 = vrot.slane %v1275, 4
      %v1278 = vshll.u32 %v550, 16
      %v1280 = vrot.slane %v1278, 5
      %v1281 = vor.u32 %v1277, %v1280
      %v1282 = vrot.slane %v1281, 4
      %v1284 = vshll.u32 %v551, 16
      %v1286 = vrot.slane %v1284, 5
      %v1287 = vsel %vm797, %v1282, %v1286
      %v1289 = vshrl.u32 %v554, 16
      %v1291 = vrot.slane %v1289, 4
      %v1292 = vshll.u32 %v554, 16
      %v1294 = vrot.slane %v1292, 5
      %v1295 = vor.u32 %v1291, %v1294
      %v1296 = vrot.slane %v1295, 4
      %v1298 = vshll.u32 %v555, 16
      %v1300 = vrot.slane %v1298, 5
      %v1301 = vsel %vm797, %v1296, %v1300
      %v1303 = vshrl.u32 %v558, 16
      %v1305 = vrot.slane %v1303, 4
      %v1306 = vshll.u32 %v558, 16
      %v1308 = vrot.slane %v1306, 5
      %v1309 = vor.u32 %v1305, %v1308
      %v1310 = vrot.slane %v1309, 4
      %v1312 = vshll.u32 %v559, 16
      %v1314 = vrot.slane %v1312, 5
      %v1315 = vsel %vm797, %v1310, %v1314
      %v1317 = vshrl.u32 %v562, 16
      %v1319 = vrot.slane %v1317, 4
      %v1320 = vshll.u32 %v562, 16
      %v1322 = vrot.slane %v1320, 5
      %v1323 = vor.u32 %v1319, %v1322
      %v1324 = vrot.slane %v1323, 4
      %v1326 = vshll.u32 %v563, 16
      %v1328 = vrot.slane %v1326, 5
      %v1329 = vsel %vm797, %v1324, %v1328
      %v1331 = vshrl.u32 %v566, 16
      %v1333 = vrot.slane %v1331, 4
      %v1334 = vshll.u32 %v566, 16
      %v1336 = vrot.slane %v1334, 5
      %v1337 = vor.u32 %v1333, %v1336
      %v1338 = vrot.slane %v1337, 4
      %v1340 = vshll.u32 %v567, 16
      %v1342 = vrot.slane %v1340, 5
      %v1343 = vsel %vm797, %v1338, %v1342
      %s1344 = scalar_lea.vmem %s518, 10
      %v1345 = vld [vmem:[%s1344] sm:$0x3]
      %v1346 = vunpack.c.l.b16 %v1245
      %v1347 = vunpack.c.l.b16 %v1259
      %v1348 = vunpack.c.l.b16 %v1273
      %v1349 = vunpack.c.l.b16 %v1287
      %v1350 = vunpack.c.l.b16 %v1301
      %v1351 = vunpack.c.l.b16 %v1315
      %v1352 = vunpack.c.l.b16 %v1329
      %v1353 = vunpack.c.l.b16 %v1343
      %v1354 = vpack.c.b16 %v1347, %v1346
      %v1355 = vpack.c.b16 %v1349, %v1348
      %v1356 = vpack.c.b16 %v1351, %v1350
      %v1357 = vpack.c.b16 %v1353, %v1352
      %v1359 = vsel %vm610, %v1354, 0
      %v1362 = vsel %vm610, %v1355, 0
      %v1365 = vsel %vm610, %v1356, 0
      %v1368 = vsel %vm610, %v1357, 0
      %v1371 = vand.u32 %v1345, %v626
      %1373 = vmatprep.subr.bf16.mxu0 0
      %1374 = vmatpush1.bf16.msra.mxu0 0
      %1375 = vmatprep.subr.bf16.mxu0 0
      %1376 = vmatpush1.bf16.msra.mxu0 0
      %1377 = vmatprep.subr.bf16.mxu0 0
      %1378 = vmatpush1.bf16.msra.mxu0 0
      %1379 = vmatprep.subr.bf16.mxu0 0
      %1380 = vmatpush1.bf16.msra.mxu0 0
      %1381 = vmatprep.subr.bf16.mxu0 0
      %1382 = vmatpush1.bf16.msra.mxu0 0
      %1383 = vmatprep.subr.bf16.mxu0 0
      %1384 = vmatpush1.bf16.msra.mxu0 0
      %1385 = vmatprep.subr.bf16.mxu0 0
      %1386 = vmatpush1.bf16.msra.mxu0 0
      %1387 = vmatprep.subr.bf16.mxu0 0
      %1388 = vmatpush1.bf16.msra.mxu0 %v1371
      %1389 = vmatprep.subr.bf16.mxu0 0
      %1390 = vmatpush2.bf16.msra.mxu0 0
      %1391 = vmatprep.subr.bf16.mxu0 0
      %1392 = vmatpush2.bf16.msra.mxu0 0
      %1393 = vmatprep.subr.bf16.mxu0 0
      %1394 = vmatpush2.bf16.msra.mxu0 0
      %1395 = vmatprep.subr.bf16.mxu0 0
      %1396 = vmatpush2.bf16.msra.mxu0 0
      %1397 = vmatprep.subr.bf16.mxu0 0
      %1398 = vmatpush2.bf16.msra.mxu0 0
      %1399 = vmatprep.subr.bf16.mxu0 0
      %1400 = vmatpush2.bf16.msra.mxu0 0
      %1401 = vmatprep.subr.bf16.mxu0 0
      %1402 = vmatpush2.bf16.msra.mxu0 0
      %1403 = vmatprep.subr.bf16.mxu0 0
      %1404 = vmatpush2.bf16.msra.mxu0 0
      %1405 = vmatprep.mubr.bf16.mxu0 0
      %1406 = vmatmul.mubr.bf16.gmra.mxu0 %v1359
      %v1407 = vpop.f32.mrf.mxu0
      %v1408 = vadd.f32 0.0, %v1407
      %v1409 = vpop.f32.mrf.mxu0
      %v1410 = vpop.f32.mrf.mxu0
      %v1411 = vadd.f32 0.0, %v1410
      %v1412 = vpop.f32.mrf.mxu0
      %1413 = vmatprep.mubr.bf16.mxu0 0
      %1414 = vmatmul.mubr.bf16.gmra.mxu0 %v1362
      %v1415 = vpop.f32.mrf.mxu0
      %v1416 = vadd.f32 0.0, %v1415
      %v1417 = vpop.f32.mrf.mxu0
      %v1418 = vpop.f32.mrf.mxu0
      %v1419 = vadd.f32 0.0, %v1418
      %v1420 = vpop.f32.mrf.mxu0
      %1421 = vmatprep.mubr.bf16.mxu0 0
      %1422 = vmatmul.mubr.bf16.gmra.mxu0 %v1365
      %v1423 = vpop.f32.mrf.mxu0
      %v1424 = vadd.f32 0.0, %v1423
      %v1425 = vpop.f32.mrf.mxu0
      %v1426 = vpop.f32.mrf.mxu0
      %v1427 = vadd.f32 0.0, %v1426
      %v1428 = vpop.f32.mrf.mxu0
      %1429 = vmatprep.mubr.bf16.mxu0 0
      %1430 = vmatmul.mubr.bf16.gmra.mxu0 %v1368
      %v1431 = vpop.f32.mrf.mxu0
      %v1432 = vadd.f32 0.0, %v1431
      %v1433 = vpop.f32.mrf.mxu0
      %v1434 = vpop.f32.mrf.mxu0
      %v1435 = vadd.f32 0.0, %v1434
      %v1436 = vpop.f32.mrf.mxu0
      %1437 = vdwg.mxu0
      %v1438 = vadd.f32 %v1224, %v1408
      %v1439 = vadd.f32 %v1225, %v1411
      %v1440 = vadd.f32 %v1226, %v1416
      %v1441 = vadd.f32 %v1227, %v1419
      %v1442 = vadd.f32 %v1228, %v1424
      %v1443 = vadd.f32 %v1229, %v1427
      %v1444 = vadd.f32 %v1230, %v1432
      %v1445 = vadd.f32 %v1231, %v1435
      %s1446 = scalar_lea.vmem %s518, 12
      %v1447 = vld [vmem:[%s1446] sm:$0x3]
      %v1449 = vunpack.c.l.b16 %v584
      %v1450 = vpack.c.b16 %v705, %v704
      %v1451 = vpack.c.b16 %v707, %v706
      %v1452 = vpack.c.b16 %v709, %v708
      %v1453 = vpack.c.b16 %v1449, %v710
      %v1455 = vsel %vm610, %v1450, 0
      %v1458 = vsel %vm610, %v1451, 0
      %v1461 = vsel %vm610, %v1452, 0
      %v1464 = vsel %vm610, %v1453, 0
      %v1467 = vand.u32 %v1447, %v626
      %1469 = vmatprep.subr.bf16.mxu0 0
      %1470 = vmatpush1.bf16.msra.mxu0 0
      %1471 = vmatprep.subr.bf16.mxu0 0
      %1472 = vmatpush1.bf16.msra.mxu0 0
      %1473 = vmatprep.subr.bf16.mxu0 0
      %1474 = vmatpush1.bf16.msra.mxu0 0
      %1475 = vmatprep.subr.bf16.mxu0 0
      %1476 = vmatpush1.bf16.msra.mxu0 0
      %1477 = vmatprep.subr.bf16.mxu0 0
      %1478 = vmatpush1.bf16.msra.mxu0 0
      %1479 = vmatprep.subr.bf16.mxu0 0
      %1480 = vmatpush1.bf16.msra.mxu0 0
      %1481 = vmatprep.subr.bf16.mxu0 0
      %1482 = vmatpush1.bf16.msra.mxu0 0
      %1483 = vmatprep.subr.bf16.mxu0 0
      %1484 = vmatpush1.bf16.msra.mxu0 %v1467
      %1485 = vmatprep.subr.bf16.mxu0 0
      %1486 = vmatpush2.bf16.msra.mxu0 0
      %1487 = vmatprep.subr.bf16.mxu0 0
      %1488 = vmatpush2.bf16.msra.mxu0 0
      %1489 = vmatprep.subr.bf16.mxu0 0
      %1490 = vmatpush2.bf16.msra.mxu0 0
      %1491 = vmatprep.subr.bf16.mxu0 0
      %1492 = vmatpush2.bf16.msra.mxu0 0
      %1493 = vmatprep.subr.bf16.mxu0 0
      %1494 = vmatpush2.bf16.msra.mxu0 0
      %1495 = vmatprep.subr.bf16.mxu0 0
      %1496 = vmatpush2.bf16.msra.mxu0 0
      %1497 = vmatprep.subr.bf16.mxu0 0
      %1498 = vmatpush2.bf16.msra.mxu0 0
      %1499 = vmatprep.subr.bf16.mxu0 0
      %1500 = vmatpush2.bf16.msra.mxu0 0
      %1501 = vmatprep.mubr.bf16.mxu0 0
      %1502 = vmatmul.mubr.bf16.gmra.mxu0 %v1455
      %v1503 = vpop.f32.mrf.mxu0
      %v1504 = vadd.f32 0.0, %v1503
      %v1505 = vpop.f32.mrf.mxu0
      %v1506 = vpop.f32.mrf.mxu0
      %v1507 = vadd.f32 0.0, %v1506
      %v1508 = vpop.f32.mrf.mxu0
      %1509 = vmatprep.mubr.bf16.mxu0 0
      %1510 = vmatmul.mubr.bf16.gmra.mxu0 %v1458
      %v1511 = vpop.f32.mrf.mxu0
      %v1512 = vadd.f32 0.0, %v1511
      %v1513 = vpop.f32.mrf.mxu0
      %v1514 = vpop.f32.mrf.mxu0
      %v1515 = vadd.f32 0.0, %v1514
      %v1516 = vpop.f32.mrf.mxu0
      %1517 = vmatprep.mubr.bf16.mxu0 0
      %1518 = vmatmul.mubr.bf16.gmra.mxu0 %v1461
      %v1519 = vpop.f32.mrf.mxu0
      %v1520 = vadd.f32 0.0, %v1519
      %v1521 = vpop.f32.mrf.mxu0
      %v1522 = vpop.f32.mrf.mxu0
      %v1523 = vadd.f32 0.0, %v1522
      %v1524 = vpop.f32.mrf.mxu0
      %1525 = vmatprep.mubr.bf16.mxu0 0
      %1526 = vmatmul.mubr.bf16.gmra.mxu0 %v1464
      %v1527 = vpop.f32.mrf.mxu0
      %v1528 = vadd.f32 0.0, %v1527
      %v1529 = vpop.f32.mrf.mxu0
      %v1530 = vpop.f32.mrf.mxu0
      %v1531 = vadd.f32 0.0, %v1530
      %v1532 = vpop.f32.mrf.mxu0
      %1533 = vdwg.mxu0
      %v1534 = vadd.f32 %v1438, %v1504
      %v1535 = vadd.f32 %v1439, %v1507
      %v1536 = vadd.f32 %v1440, %v1512
      %v1537 = vadd.f32 %v1441, %v1515
      %v1538 = vadd.f32 %v1442, %v1520
      %v1539 = vadd.f32 %v1443, %v1523
      %v1540 = vadd.f32 %v1444, %v1528
      %v1541 = vadd.f32 %v1445, %v1531
      %s1542 = scalar_lea.vmem %s518, 14
      %v1543 = vld [vmem:[%s1542] sm:$0x3]
      %v1545 = vunpack.c.l.b16 %v586
      %v1546 = vpack.c.b16 %v600, %v599
      %v1547 = vpack.c.b16 %v602, %v601
      %v1548 = vpack.c.b16 %v604, %v603
      %v1549 = vpack.c.b16 %v1545, %v605
      %v1551 = vsel %vm610, %v1546, 0
      %v1554 = vsel %vm610, %v1547, 0
      %v1557 = vsel %vm610, %v1548, 0
      %v1560 = vsel %vm610, %v1549, 0
      %v1563 = vand.u32 %v1543, %v626
      %1565 = vmatprep.subr.bf16.mxu0 0
      %1566 = vmatpush1.bf16.msra.mxu0 0
      %1567 = vmatprep.subr.bf16.mxu0 0
      %1568 = vmatpush1.bf16.msra.mxu0 0
      %1569 = vmatprep.subr.bf16.mxu0 0
      %1570 = vmatpush1.bf16.msra.mxu0 0
      %1571 = vmatprep.subr.bf16.mxu0 0
      %1572 = vmatpush1.bf16.msra.mxu0 0
      %1573 = vmatprep.subr.bf16.mxu0 0
      %1574 = vmatpush1.bf16.msra.mxu0 0
      %1575 = vmatprep.subr.bf16.mxu0 0
      %1576 = vmatpush1.bf16.msra.mxu0 0
      %1577 = vmatprep.subr.bf16.mxu0 0
      %1578 = vmatpush1.bf16.msra.mxu0 0
      %1579 = vmatprep.subr.bf16.mxu0 0
      %1580 = vmatpush1.bf16.msra.mxu0 %v1563
      %1581 = vmatprep.subr.bf16.mxu0 0
      %1582 = vmatpush2.bf16.msra.mxu0 0
      %1583 = vmatprep.subr.bf16.mxu0 0
      %1584 = vmatpush2.bf16.msra.mxu0 0
      %1585 = vmatprep.subr.bf16.mxu0 0
      %1586 = vmatpush2.bf16.msra.mxu0 0
      %1587 = vmatprep.subr.bf16.mxu0 0
      %1588 = vmatpush2.bf16.msra.mxu0 0
      %1589 = vmatprep.subr.bf16.mxu0 0
      %1590 = vmatpush2.bf16.msra.mxu0 0
      %1591 = vmatprep.subr.bf16.mxu0 0
      %1592 = vmatpush2.bf16.msra.mxu0 0
      %1593 = vmatprep.subr.bf16.mxu0 0
      %1594 = vmatpush2.bf16.msra.mxu0 0
      %1595 = vmatprep.subr.bf16.mxu0 0
      %1596 = vmatpush2.bf16.msra.mxu0 0
      %1597 = vmatprep.mubr.bf16.mxu0 0
      %1598 = vmatmul.mubr.bf16.gmra.mxu0 %v1551
      %v1599 = vpop.f32.mrf.mxu0
      %v1600 = vadd.f32 0.0, %v1599
      %v1601 = vpop.f32.mrf.mxu0
      %v1602 = vpop.f32.mrf.mxu0
      %v1603 = vadd.f32 0.0, %v1602
      %v1604 = vpop.f32.mrf.mxu0
      %1605 = vmatprep.mubr.bf16.mxu0 0
      %1606 = vmatmul.mubr.bf16.gmra.mxu0 %v1554
      %v1607 = vpop.f32.mrf.mxu0
      %v1608 = vadd.f32 0.0, %v1607
      %v1609 = vpop.f32.mrf.mxu0
      %v1610 = vpop.f32.mrf.mxu0
      %v1611 = vadd.f32 0.0, %v1610
      %v1612 = vpop.f32.mrf.mxu0
      %1613 = vmatprep.mubr.bf16.mxu0 0
      %1614 = vmatmul.mubr.bf16.gmra.mxu0 %v1557
      %v1615 = vpop.f32.mrf.mxu0
      %v1616 = vadd.f32 0.0, %v1615
      %v1617 = vpop.f32.mrf.mxu0
      %v1618 = vpop.f32.mrf.mxu0
      %v1619 = vadd.f32 0.0, %v1618
      %v1620 = vpop.f32.mrf.mxu0
      %1621 = vmatprep.mubr.bf16.mxu0 0
      %1622 = vmatmul.mubr.bf16.gmra.mxu0 %v1560
      %v1623 = vpop.f32.mrf.mxu0
      %v1624 = vadd.f32 0.0, %v1623
      %v1625 = vpop.f32.mrf.mxu0
      %v1626 = vpop.f32.mrf.mxu0
      %v1627 = vadd.f32 0.0, %v1626
      %v1628 = vpop.f32.mrf.mxu0
      %1629 = vdwg.mxu0
      %v1630 = vadd.f32 %v1534, %v1600
      %v1631 = vadd.f32 %v1535, %v1603
      %v1632 = vadd.f32 %v1536, %v1608
      %v1633 = vadd.f32 %v1537, %v1611
      %v1634 = vadd.f32 %v1538, %v1616
      %v1635 = vadd.f32 %v1539, %v1619
      %v1636 = vadd.f32 %v1540, %v1624
      %v1637 = vadd.f32 %v1541, %v1627
      %v1639 = vshrl.u32 %v584, 16
      %v1641 = vrot.slane %v1639, 4
      %v1642 = vshll.u32 %v584, 16
      %v1644 = vrot.slane %v1642, 5
      %v1645 = vor.u32 %v1641, %v1644
      %v1646 = vrot.slane %v1645, 4
      %v1648 = vshll.u32 %v585, 16
      %v1650 = vrot.slane %v1648, 5
      %v1651 = vsel %vm797, %v1646, %v1650
      %s1652 = scalar_lea.vmem %s518, 16
      %v1653 = vld [vmem:[%s1652] sm:$0x3]
      %v1654 = vunpack.c.l.b16 %v1651
      %v1655 = vpack.c.b16 %v914, %v913
      %v1656 = vpack.c.b16 %v916, %v915
      %v1657 = vpack.c.b16 %v918, %v917
      %v1658 = vpack.c.b16 %v1654, %v919
      %v1660 = vsel %vm610, %v1655, 0
      %v1663 = vsel %vm610, %v1656, 0
      %v1666 = vsel %vm610, %v1657, 0
      %v1669 = vsel %vm610, %v1658, 0
      %v1672 = vand.u32 %v1653, %v626
      %1674 = vmatprep.subr.bf16.mxu0 0
      %1675 = vmatpush1.bf16.msra.mxu0 0
      %1676 = vmatprep.subr.bf16.mxu0 0
      %1677 = vmatpush1.bf16.msra.mxu0 0
      %1678 = vmatprep.subr.bf16.mxu0 0
      %1679 = vmatpush1.bf16.msra.mxu0 0
      %1680 = vmatprep.subr.bf16.mxu0 0
      %1681 = vmatpush1.bf16.msra.mxu0 0
      %1682 = vmatprep.subr.bf16.mxu0 0
      %1683 = vmatpush1.bf16.msra.mxu0 0
      %1684 = vmatprep.subr.bf16.mxu0 0
      %1685 = vmatpush1.bf16.msra.mxu0 0
      %1686 = vmatprep.subr.bf16.mxu0 0
      %1687 = vmatpush1.bf16.msra.mxu0 0
      %1688 = vmatprep.subr.bf16.mxu0 0
      %1689 = vmatpush1.bf16.msra.mxu0 %v1672
      %1690 = vmatprep.subr.bf16.mxu0 0
      %1691 = vmatpush2.bf16.msra.mxu0 0
      %1692 = vmatprep.subr.bf16.mxu0 0
      %1693 = vmatpush2.bf16.msra.mxu0 0
      %1694 = vmatprep.subr.bf16.mxu0 0
      %1695 = vmatpush2.bf16.msra.mxu0 0
      %1696 = vmatprep.subr.bf16.mxu0 0
      %1697 = vmatpush2.bf16.msra.mxu0 0
      %1698 = vmatprep.subr.bf16.mxu0 0
      %1699 = vmatpush2.bf16.msra.mxu0 0
      %1700 = vmatprep.subr.bf16.mxu0 0
      %1701 = vmatpush2.bf16.msra.mxu0 0
      %1702 = vmatprep.subr.bf16.mxu0 0
      %1703 = vmatpush2.bf16.msra.mxu0 0
      %1704 = vmatprep.subr.bf16.mxu0 0
      %1705 = vmatpush2.bf16.msra.mxu0 0
      %1706 = vmatprep.mubr.bf16.mxu0 0
      %1707 = vmatmul.mubr.bf16.gmra.mxu0 %v1660
      %v1708 = vpop.f32.mrf.mxu0
      %v1709 = vadd.f32 0.0, %v1708
      %v1710 = vpop.f32.mrf.mxu0
      %v1711 = vpop.f32.mrf.mxu0
      %v1712 = vadd.f32 0.0, %v1711
      %v1713 = vpop.f32.mrf.mxu0
      %1714 = vmatprep.mubr.bf16.mxu0 0
      %1715 = vmatmul.mubr.bf16.gmra.mxu0 %v1663
      %v1716 = vpop.f32.mrf.mxu0
      %v1717 = vadd.f32 0.0, %v1716
      %v1718 = vpop.f32.mrf.mxu0
      %v1719 = vpop.f32.mrf.mxu0
      %v1720 = vadd.f32 0.0, %v1719
      %v1721 = vpop.f32.mrf.mxu0
      %1722 = vmatprep.mubr.bf16.mxu0 0
      %1723 = vmatmul.mubr.bf16.gmra.mxu0 %v1666
      %v1724 = vpop.f32.mrf.mxu0
      %v1725 = vadd.f32 0.0, %v1724
      %v1726 = vpop.f32.mrf.mxu0
      %v1727 = vpop.f32.mrf.mxu0
      %v1728 = vadd.f32 0.0, %v1727
      %v1729 = vpop.f32.mrf.mxu0
      %1730 = vmatprep.mubr.bf16.mxu0 0
      %1731 = vmatmul.mubr.bf16.gmra.mxu0 %v1669
      %v1732 = vpop.f32.mrf.mxu0
      %v1733 = vadd.f32 0.0, %v1732
      %v1734 = vpop.f32.mrf.mxu0
      %v1735 = vpop.f32.mrf.mxu0
      %v1736 = vadd.f32 0.0, %v1735
      %v1737 = vpop.f32.mrf.mxu0
      %1738 = vdwg.mxu0
      %v1739 = vadd.f32 %v1630, %v1709
      %v1740 = vadd.f32 %v1631, %v1712
      %v1741 = vadd.f32 %v1632, %v1717
      %v1742 = vadd.f32 %v1633, %v1720
      %v1743 = vadd.f32 %v1634, %v1725
      %v1744 = vadd.f32 %v1635, %v1728
      %v1745 = vadd.f32 %v1636, %v1733
      %v1746 = vadd.f32 %v1637, %v1736
      %v1747 = vld [vmem:[%s521] sm:$0x1]
      %v1749 = vlaneseq
      %v1750 = vshrl.u32 %v1749, 7
      %v1751 = vsub.s32 0, %v1750
      %v1752 = vrot.slane %v1747, %v1751
      %v1754 = vadd.f32 %v1739, %v1752
      %v1755 = vadd.f32 %v1740, %v1752
      %v1756 = vadd.f32 %v1741, %v1752
      %v1757 = vadd.f32 %v1742, %v1752
      %v1758 = vadd.f32 %v1743, %v1752
      %v1759 = vadd.f32 %v1744, %v1752
      %v1760 = vadd.f32 %v1745, %v1752
      %v1761 = vadd.f32 %v1746, %v1752
      %v1762 = vpack.c.bf16 %v1755, %v1754
      %v1763 = vpack.c.bf16 %v1757, %v1756
      %v1764 = vpack.c.bf16 %v1759, %v1758
      %v1765 = vpack.c.bf16 %v1761, %v1760
      %v1770 = vunpack.c.l.b16 %v1762
      %v1771 = vunpack.c.h.b16 %v1762
      %v1772 = vunpack.c.l.b16 %v1763
      %v1773 = vunpack.c.h.b16 %v1763
      %v1774 = vunpack.c.l.b16 %v1764
      %v1775 = vunpack.c.h.b16 %v1764
      %v1776 = vunpack.c.l.b16 %v1765
      %v1777 = vunpack.c.h.b16 %v1765
      %v1778 = vpack.c.b16 %v1770, %v1770
      %v1779 = vpack.c.b16 %v1771, %v1771
      %v1780 = vpack.c.b16 %v1772, %v1772
      %v1781 = vpack.c.b16 %v1773, %v1773
      %v1782 = vpack.c.b16 %v1774, %v1774
      %v1783 = vpack.c.b16 %v1775, %v1775
      %v1784 = vpack.c.b16 %v1776, %v1776
      %v1785 = vpack.c.b16 %v1777, %v1777
      %vm1794 = vcmask 257024
      %1795 = vst.msk [vmem:[%s533] sm:$0xf] %vm1794, %v1778
      %1796 = vst.msk [vmem:[%s533 + $0x4] sm:$0xf] %vm1794, %v1779
      %1797 = vst.msk [vmem:[%s533 + $0x8] sm:$0xf] %vm1794, %v1780
      %1798 = vst.msk [vmem:[%s533 + $0xc] sm:$0xf] %vm1794, %v1781
      %1799 = vst.msk [vmem:[%s533 + $0x10] sm:$0xf] %vm1794, %v1782
      %1800 = vst.msk [vmem:[%s533 + $0x14] sm:$0xf] %vm1794, %v1783
      %1801 = vst.msk [vmem:[%s533 + $0x18] sm:$0xf] %vm1794, %v1784
      %1802 = vst.msk [vmem:[%s533 + $0x1c] sm:$0xf] %vm1794, %v1785
      %s1803 = smul.u32 8, %s24
      %p1804 = scmp.lt.s32.totalorder %s22, 1
      %s1805 = scalar_select %p1804, %s22, 1
      %p1806 = scmp.lt.s32.totalorder %s1803, 7
      %s1807 = scalar_select %p1806, %s1803, 7
      %p1808 = scmp.lt.s32.totalorder %s23, 0
      %s1809 = scalar_select %p1808, %s23, 0
      %s1810 = sadd.s32 %s1809, %s1807
      %s1811 = smul.addr %s1805, 8
      %s1812 = sadd.s32 %s1810, %s1811
      %s1813 = smul.addr %s1812, 4
      %s1814 = scalar_lea.vmem %s6, %s1813
      // Predicated region
      $region45: #{tpu_custom_call.1} parent=43 // pred_check
        %p1815 = pneg %p230
      $region46: #{tpu_custom_call.1} parent=43 // pred_check_branch
        %1817 = sbr.rel (%p1815) target = $region48
      $region47: #{tpu_custom_call.1} parent=43 // pred_region
        %s1818 = smul.u32 8, %s24
      $region48: #{tpu_custom_call.1} parent=43 // pred_fallthru
        _
    $region44: #{tpu_custom_call.1} parent=5 // pred_fallthru
      _
    %p1819 = scmp.le.s32.totalorder 2, %s12
    // Predicated region
    $region49: #{tpu_custom_call.1} parent=5 // pred_check
      %p1820 = pneg %p1819
    $region50: #{tpu_custom_call.1} parent=5 // pred_check_branch
      %1822 = sbr.rel (%p1820) target = $region52
    $region51: #{tpu_custom_call.1} parent=5 // pred_region
      %s1823 = ssub.s32 %s12, 2
      // Predicated region
      $region53: #{tpu_custom_call.1} parent=51 // pred_check
        %p1824 = pneg %p236
      $region54: #{tpu_custom_call.1} parent=51 // pred_check_branch
        %1826 = sbr.rel (%p1824) target = $region56
      $region55: #{tpu_custom_call.1} parent=51 // pred_region
        %s1827 = smul.u32 8, %s27
        %p1828 = scmp.lt.s32.totalorder %s25, 1
        %s1829 = scalar_select %p1828, %s25, 1
        %p1830 = scmp.lt.s32.totalorder %s1827, 7
        %s1831 = scalar_select %p1830, %s1827, 7
        %p1832 = scmp.lt.s32.totalorder %s26, 0
        %s1833 = scalar_select %p1832, %s26, 0
        %s1834 = sadd.s32 %s1833, %s1831
        %s1835 = smul.addr %s1829, 8
        %s1836 = sadd.s32 %s1834, %s1835
        %s1837 = smul.addr %s1836, 4
        %s1838 = scalar_lea.vmem %s6, %s1837
      $region56: #{tpu_custom_call.1} parent=51 // pred_fallthru
        _
    $region52: #{tpu_custom_call.1} parent=5 // pred_fallthru
      _
  $region6: #{tpu_custom_call.1} parent=0 // loop_footer
    %s16 = sadd.s32 1, %s12
  $region7: #{tpu_custom_call.1} parent=0 // loop_footer_branch
    %11 = sbr.rel target = $region3
  $region8: #{tpu_custom_call.1} parent=0 // loop_exit
    _

</llo_original>
